<compile_context>
chip_gen: v6e
topology: v6e:2x2x1
jax: 0.10.0
libtpu: 0.0.40
codegen_flags: <defaults>
</compile_context>

<pallas_src>
import jax
import jax.numpy as jnp
from jax.experimental import pallas as pl
from jax.experimental.pallas import tpu as pltpu

# ----------------------------- problem sizes -------------------------------
BATCH = 2
SEQ = 8
VOCAB = 16
HIDDEN = 32                          # encoder.hidden_size
EMBED = 32                           # embedding dim (== hidden, as in EncoderRNN)
NUMCLASS = 2
INNER = int(HIDDEN + NUMCLASS / 2)   # = 33, the module's `inner`
INNER_PAD = 128                      # lane-friendly zero-padding of `inner`

_VMEM = pl.BlockSpec(memory_space=pltpu.MemorySpace.VMEM)


# ------------------------------ fused kernel --------------------------------
def _fused_kernel(x_ref, wih_ref, whh_ref, bih_ref, bhh_ref,
                  w1_ref, b1_ref, w2_ref, b2_ref, out_ref):
    """Frozen GRU encoder + (Linear, ReLU, Linear, LogSoftmax(dim=0)) head.

    x_ref   : (B, S, E)        embedded inputs, batch-major
    wih_ref : (E, 3H)          gate-concatenated input->hidden weights (r|z|n)
    whh_ref : (H, 3H)          gate-concatenated hidden->hidden weights (r|z|n)
    bih_ref : (1, 3H)          input biases (folded into hoisted projection)
    bhh_ref : (1, 3H)          hidden biases (one add per recurrence step)
    w1_ref  : (H, INNER_PAD)   classifier layer 1, zero-padded columns
    b1_ref  : (1, INNER_PAD)
    w2_ref  : (INNER_PAD, C)   classifier layer 2, zero-padded rows
    b2_ref  : (1, C)
    out_ref : (B*S, C)         log-probs, batch-major flat rows (row = b*S + t)
    """
    B, S, _ = x_ref.shape
    H = whh_ref.shape[0]

    x = x_ref[...]                                                  # (B, S, E)

    # Row-permute once to time-major flat order (row = t*B + b) so every
    # recurrence step reads a contiguous (B, 3H) slice.  Static slices + one
    # concat; off the serial h-dependency chain.
    x_tm = jnp.concatenate(
        [x[b][t:t + 1, :] for t in range(S) for b in range(B)], axis=0)   # (S*B, E)

    # Hoisted input projection: one matmul for all timesteps & gates,
    # input bias pre-folded.
    gx = (jnp.dot(x_tm, wih_ref[...], preferred_element_type=jnp.float32)
          + bih_ref[...])                                           # (S*B, 3H)

    whh = whh_ref[...]                                              # (H, 3H)
    bhh = bhh_ref[...]                                              # (1, 3H)

    # Recurrence: one (B,H)x(H,3H) matmul + one bias add per step, fully
    # unrolled (S is a small static constant).
    h = jnp.zeros((B, H), dtype=jnp.float32)
    hs = []
    for t in range(S):
        gh = jnp.dot(h, whh, preferred_element_type=jnp.float32) + bhh   # (B, 3H)
        gx_t = gx[t * B:(t + 1) * B, :]                                  # (B, 3H)
        r = jax.nn.sigmoid(gx_t[:, :H] + gh[:, :H])
        z = jax.nn.sigmoid(gx_t[:, H:2 * H] + gh[:, H:2 * H])
        # PyTorch GRU: n = tanh(x@W_in + b_in + r * (h@W_hn + b_hn))
        n = jnp.tanh(gx_t[:, 2 * H:] + r * gh[:, 2 * H:])
        h = (1.0 - z) * n + z * h
        hs.append(h)

    # Encoder outputs stay on-chip as a traced value (no HBM round trip).
    enc_tm = jnp.concatenate(hs, axis=0)                            # (S*B, H), row t*B+b

    # Classifier on the flattened slab: Linear -> ReLU -> Linear.
    hid = jnp.maximum(
        jnp.dot(enc_tm, w1_ref[...], preferred_element_type=jnp.float32)
        + b1_ref[...], 0.0)                                         # (S*B, INNER_PAD)
    logits_tm = (jnp.dot(hid, w2_ref[...], preferred_element_type=jnp.float32)
                 + b2_ref[...])                                     # (S*B, C)

    # Regroup logits by batch (row = b*S + t) with static slices, then take the
    # log-softmax across the batch axis (legacy nn.LogSoftmax() default dim=0
    # for a 3-D input) on contiguous (S, C) blocks.
    blocks = [
        jnp.concatenate([logits_tm[t * B + b:t * B + b + 1, :] for t in range(S)],
                        axis=0)                                      # (S, C)
        for b in range(B)
    ]
    m = blocks[0]
    for b in range(1, B):
        m = jnp.maximum(m, blocks[b])
    ssum = jnp.exp(blocks[0] - m)
    for b in range(1, B):
        ssum = ssum + jnp.exp(blocks[b] - m)
    lse = m + jnp.log(ssum)

    # One lane-dense store of the whole output slab.
    out_ref[...] = jnp.concatenate([blk - lse for blk in blocks], axis=0)  # (B*S, C)


# ------------------------------- wrappers -----------------------------------
def pack_params(params):
    """One-time repacking: concatenate GRU gate weights, zero-pad classifier."""
    w_ih, w_hh = params["w_ih"], params["w_hh"]          # (3, E, H), (3, H, H)
    b_ih, b_hh = params["b_ih"], params["b_hh"]          # (3, 1, H),  (3, 1, H)
    pad = INNER_PAD - INNER
    return {
        "embedding": params["embedding"],
        "wih_cat": jnp.concatenate([w_ih[0], w_ih[1], w_ih[2]], axis=1),   # (E, 3H)
        "whh_cat": jnp.concatenate([w_hh[0], w_hh[1], w_hh[2]], axis=1),   # (H, 3H)
        "bih_cat": jnp.concatenate([b_ih[0], b_ih[1], b_ih[2]], axis=1),   # (1, 3H)
        "bhh_cat": jnp.concatenate([b_hh[0], b_hh[1], b_hh[2]], axis=1),   # (1, 3H)
        "w1_pad": jnp.pad(params["w1"], ((0, 0), (0, pad))),               # (H, 128)
        "b1_pad": jnp.pad(params["b1"], ((0, 0), (0, pad))),               # (1, 128)
        "w2_pad": jnp.pad(params["w2"], ((0, pad), (0, 0))),               # (128, C)
        "b2": params["b2"],                                                # (1, C)
    }


@jax.jit
def diagnostic_classifier_forward(tokens, packed):
    B, S = tokens.shape
    C = packed["b2"].shape[-1]
    # Embedding lookup as glue (input_lengths=None in the module -> no packing).
    x = packed["embedding"][tokens].astype(jnp.float32)             # (B, S, E)
    out_flat = pl.pallas_call(
        _fused_kernel,
        out_shape=jax.ShapeDtypeStruct((B * S, C), jnp.float32),
        in_specs=[_VMEM] * 9,
        out_specs=_VMEM,
    )(x, packed["wih_cat"], packed["whh_cat"], packed["bih_cat"],
      packed["bhh_cat"], packed["w1_pad"], packed["b1_pad"],
      packed["w2_pad"], packed["b2"])
    return out_flat.reshape(B, S, C)                                 # free leading-dim split


# ----------------------------- plain-JAX reference --------------------------
def reference_forward(tokens, params):
    x = params["embedding"][tokens].astype(jnp.float32)
    B, S, _ = x.shape
    H = params["w_hh"].shape[-1]
    h = jnp.zeros((B, H), jnp.float32)
    outs = []
    for t in range(S):
        x_t = x[:, t, :]
        r = jax.nn.sigmoid(x_t @ params["w_ih"][0] + params["b_ih"][0]
                           + h @ params["w_hh"][0] + params["b_hh"][0])
        z = jax.nn.sigmoid(x_t @ params["w_ih"][1] + params["b_ih"][1]
                           + h @ params["w_hh"][1] + params["b_hh"][1])
        n = jnp.tanh(x_t @ params["w_ih"][2] + params["b_ih"][2]
                     + r * (h @ params["w_hh"][2] + params["b_hh"][2]))
        h = (1.0 - z) * n + z * h
        outs.append(h)
    enc = jnp.stack(outs, axis=1)                                # (B, S, H)
    hid = jnp.maximum(enc @ params["w1"] + params["b1"], 0.0)
    logits = hid @ params["w2"] + params["b2"]
    return jax.nn.log_softmax(logits, axis=0)                    # legacy dim=0


# ------------------------------- params -------------------------------------
def init_params(key):
    ks = jax.random.split(key, 9)
    u = lambda k, shape, b: jax.random.uniform(k, shape, jnp.float32, -b, b)
    gb = 1.0 / float(jnp.sqrt(jnp.float32(HIDDEN)))
    l1b = 1.0 / float(jnp.sqrt(jnp.float32(HIDDEN)))
    l2b = 1.0 / float(jnp.sqrt(jnp.float32(INNER)))
    return {
        "embedding": jax.random.normal(ks[0], (VOCAB, EMBED), jnp.float32) * 0.1,
        "w_ih": u(ks[1], (3, EMBED, HIDDEN), gb),
        "w_hh": u(ks[2], (3, HIDDEN, HIDDEN), gb),
        "b_ih": u(ks[3], (3, 1, HIDDEN), gb),
        "b_hh": u(ks[4], (3, 1, HIDDEN), gb),
        "w1": u(ks[5], (HIDDEN, INNER), l1b),
        "b1": u(ks[6], (1, INNER), l1b),
        "w2": u(ks[7], (INNER, NUMCLASS), l2b),
        "b2": u(ks[8], (1, NUMCLASS), l2b),
    }


if __name__ == "__main__":
    key = jax.random.PRNGKey(0)
    pkey, tkey = jax.random.split(key)
    params = init_params(pkey)
    packed = pack_params(params)
    tokens = jax.random.randint(tkey, (BATCH, SEQ), 0, VOCAB, dtype=jnp.int32)

    out = diagnostic_classifier_forward(tokens, packed)
    out = jax.block_until_ready(out)

    ref = reference_forward(tokens, params)
    assert out.shape == (BATCH, SEQ, NUMCLASS), out.shape
    max_err = float(jnp.max(jnp.abs(out - ref)))
    assert max_err < 1e-4, f"max abs error {max_err}"
    print("KERNEL_OK")
</pallas_src>

<mosaic_0001>
module attributes {stable_mosaic.version = 11 : i64} {
  func.func @_fused_kernel(%arg0: memref<2x8x32xf32, #tpu.memory_space<vmem>>, %arg1: memref<32x96xf32, #tpu.memory_space<vmem>>, %arg2: memref<32x96xf32, #tpu.memory_space<vmem>>, %arg3: memref<1x96xf32, #tpu.memory_space<vmem>>, %arg4: memref<1x96xf32, #tpu.memory_space<vmem>>, %arg5: memref<32x128xf32, #tpu.memory_space<vmem>>, %arg6: memref<1x128xf32, #tpu.memory_space<vmem>>, %arg7: memref<128x2xf32, #tpu.memory_space<vmem>>, %arg8: memref<1x2xf32, #tpu.memory_space<vmem>>, %arg9: memref<16x2xf32, #tpu.memory_space<vmem>>) attributes {dimension_semantics = [], scalar_prefetch = 0 : i64, scratch_operands = 0 : i64, tpu.core_type = #tpu.core_type<tc>} {
    %c0 = arith.constant 0 : index
    %c0_0 = arith.constant 0 : index
    %c0_1 = arith.constant 0 : index
    %0 = vector.load %arg0[%c0, %c0_0, %c0_1] : memref<2x8x32xf32, #tpu.memory_space<vmem>>, vector<2x8x32xf32>
    %1 = vector.extract_strided_slice %0 {offsets = [0, 0, 0], sizes = [1, 8, 32], strides = [1, 1, 1]} : vector<2x8x32xf32> to vector<1x8x32xf32>
    %2 = vector.shape_cast %1 : vector<1x8x32xf32> to vector<8x32xf32>
    %3 = vector.extract_strided_slice %2 {offsets = [0, 0], sizes = [1, 32], strides = [1, 1]} : vector<8x32xf32> to vector<1x32xf32>
    %4 = vector.extract_strided_slice %0 {offsets = [1, 0, 0], sizes = [1, 8, 32], strides = [1, 1, 1]} : vector<2x8x32xf32> to vector<1x8x32xf32>
    %5 = vector.shape_cast %4 : vector<1x8x32xf32> to vector<8x32xf32>
    %6 = vector.extract_strided_slice %5 {offsets = [0, 0], sizes = [1, 32], strides = [1, 1]} : vector<8x32xf32> to vector<1x32xf32>
    %7 = vector.extract_strided_slice %0 {offsets = [0, 0, 0], sizes = [1, 8, 32], strides = [1, 1, 1]} : vector<2x8x32xf32> to vector<1x8x32xf32>
    %8 = vector.shape_cast %7 : vector<1x8x32xf32> to vector<8x32xf32>
    %9 = vector.extract_strided_slice %8 {offsets = [1, 0], sizes = [1, 32], strides = [1, 1]} : vector<8x32xf32> to vector<1x32xf32>
    %10 = vector.extract_strided_slice %0 {offsets = [1, 0, 0], sizes = [1, 8, 32], strides = [1, 1, 1]} : vector<2x8x32xf32> to vector<1x8x32xf32>
    %11 = vector.shape_cast %10 : vector<1x8x32xf32> to vector<8x32xf32>
    %12 = vector.extract_strided_slice %11 {offsets = [1, 0], sizes = [1, 32], strides = [1, 1]} : vector<8x32xf32> to vector<1x32xf32>
    %13 = vector.extract_strided_slice %0 {offsets = [0, 0, 0], sizes = [1, 8, 32], strides = [1, 1, 1]} : vector<2x8x32xf32> to vector<1x8x32xf32>
    %14 = vector.shape_cast %13 : vector<1x8x32xf32> to vector<8x32xf32>
    %15 = vector.extract_strided_slice %14 {offsets = [2, 0], sizes = [1, 32], strides = [1, 1]} : vector<8x32xf32> to vector<1x32xf32>
    %16 = vector.extract_strided_slice %0 {offsets = [1, 0, 0], sizes = [1, 8, 32], strides = [1, 1, 1]} : vector<2x8x32xf32> to vector<1x8x32xf32>
    %17 = vector.shape_cast %16 : vector<1x8x32xf32> to vector<8x32xf32>
    %18 = vector.extract_strided_slice %17 {offsets = [2, 0], sizes = [1, 32], strides = [1, 1]} : vector<8x32xf32> to vector<1x32xf32>
    %19 = vector.extract_strided_slice %0 {offsets = [0, 0, 0], sizes = [1, 8, 32], strides = [1, 1, 1]} : vector<2x8x32xf32> to vector<1x8x32xf32>
    %20 = vector.shape_cast %19 : vector<1x8x32xf32> to vector<8x32xf32>
    %21 = vector.extract_strided_slice %20 {offsets = [3, 0], sizes = [1, 32], strides = [1, 1]} : vector<8x32xf32> to vector<1x32xf32>
    %22 = vector.extract_strided_slice %0 {offsets = [1, 0, 0], sizes = [1, 8, 32], strides = [1, 1, 1]} : vector<2x8x32xf32> to vector<1x8x32xf32>
    %23 = vector.shape_cast %22 : vector<1x8x32xf32> to vector<8x32xf32>
    %24 = vector.extract_strided_slice %23 {offsets = [3, 0], sizes = [1, 32], strides = [1, 1]} : vector<8x32xf32> to vector<1x32xf32>
    %25 = vector.extract_strided_slice %0 {offsets = [0, 0, 0], sizes = [1, 8, 32], strides = [1, 1, 1]} : vector<2x8x32xf32> to vector<1x8x32xf32>
    %26 = vector.shape_cast %25 : vector<1x8x32xf32> to vector<8x32xf32>
    %27 = vector.extract_strided_slice %26 {offsets = [4, 0], sizes = [1, 32], strides = [1, 1]} : vector<8x32xf32> to vector<1x32xf32>
    %28 = vector.extract_strided_slice %0 {offsets = [1, 0, 0], sizes = [1, 8, 32], strides = [1, 1, 1]} : vector<2x8x32xf32> to vector<1x8x32xf32>
    %29 = vector.shape_cast %28 : vector<1x8x32xf32> to vector<8x32xf32>
    %30 = vector.extract_strided_slice %29 {offsets = [4, 0], sizes = [1, 32], strides = [1, 1]} : vector<8x32xf32> to vector<1x32xf32>
    %31 = vector.extract_strided_slice %0 {offsets = [0, 0, 0], sizes = [1, 8, 32], strides = [1, 1, 1]} : vector<2x8x32xf32> to vector<1x8x32xf32>
    %32 = vector.shape_cast %31 : vector<1x8x32xf32> to vector<8x32xf32>
    %33 = vector.extract_strided_slice %32 {offsets = [5, 0], sizes = [1, 32], strides = [1, 1]} : vector<8x32xf32> to vector<1x32xf32>
    %34 = vector.extract_strided_slice %0 {offsets = [1, 0, 0], sizes = [1, 8, 32], strides = [1, 1, 1]} : vector<2x8x32xf32> to vector<1x8x32xf32>
    %35 = vector.shape_cast %34 : vector<1x8x32xf32> to vector<8x32xf32>
    %36 = vector.extract_strided_slice %35 {offsets = [5, 0], sizes = [1, 32], strides = [1, 1]} : vector<8x32xf32> to vector<1x32xf32>
    %37 = vector.extract_strided_slice %0 {offsets = [0, 0, 0], sizes = [1, 8, 32], strides = [1, 1, 1]} : vector<2x8x32xf32> to vector<1x8x32xf32>
    %38 = vector.shape_cast %37 : vector<1x8x32xf32> to vector<8x32xf32>
    %39 = vector.extract_strided_slice %38 {offsets = [6, 0], sizes = [1, 32], strides = [1, 1]} : vector<8x32xf32> to vector<1x32xf32>
    %40 = vector.extract_strided_slice %0 {offsets = [1, 0, 0], sizes = [1, 8, 32], strides = [1, 1, 1]} : vector<2x8x32xf32> to vector<1x8x32xf32>
    %41 = vector.shape_cast %40 : vector<1x8x32xf32> to vector<8x32xf32>
    %42 = vector.extract_strided_slice %41 {offsets = [6, 0], sizes = [1, 32], strides = [1, 1]} : vector<8x32xf32> to vector<1x32xf32>
    %43 = vector.extract_strided_slice %0 {offsets = [0, 0, 0], sizes = [1, 8, 32], strides = [1, 1, 1]} : vector<2x8x32xf32> to vector<1x8x32xf32>
    %44 = vector.shape_cast %43 : vector<1x8x32xf32> to vector<8x32xf32>
    %45 = vector.extract_strided_slice %44 {offsets = [7, 0], sizes = [1, 32], strides = [1, 1]} : vector<8x32xf32> to vector<1x32xf32>
    %46 = vector.extract_strided_slice %0 {offsets = [1, 0, 0], sizes = [1, 8, 32], strides = [1, 1, 1]} : vector<2x8x32xf32> to vector<1x8x32xf32>
    %47 = vector.shape_cast %46 : vector<1x8x32xf32> to vector<8x32xf32>
    %48 = vector.extract_strided_slice %47 {offsets = [7, 0], sizes = [1, 32], strides = [1, 1]} : vector<8x32xf32> to vector<1x32xf32>
    %49 = tpu.concatenate %3, %6, %9, %12, %15, %18, %21, %24, %27, %30, %33, %36, %39, %42, %45, %48 in 0 : vector<1x32xf32>, vector<1x32xf32>, vector<1x32xf32>, vector<1x32xf32>, vector<1x32xf32>, vector<1x32xf32>, vector<1x32xf32>, vector<1x32xf32>, vector<1x32xf32>, vector<1x32xf32>, vector<1x32xf32>, vector<1x32xf32>, vector<1x32xf32>, vector<1x32xf32>, vector<1x32xf32>, vector<1x32xf32> -> vector<16x32xf32>
    %c0_2 = arith.constant 0 : index
    %c0_3 = arith.constant 0 : index
    %50 = vector.load %arg1[%c0_2, %c0_3] : memref<32x96xf32, #tpu.memory_space<vmem>>, vector<32x96xf32>
    %cst = arith.constant dense<0.000000e+00> : vector<16x96xf32>
    %51 = tpu.matmul %49, %50, %cst {dimension_numbers = #tpu.dot_dimension_numbers<[1], [0], [0], [1], [0, 0, 1, 1], [], []>} : vector<16x32xf32>, vector<32x96xf32>, vector<16x96xf32> -> vector<16x96xf32>
    %c0_4 = arith.constant 0 : index
    %c0_5 = arith.constant 0 : index
    %52 = vector.load %arg3[%c0_4, %c0_5] : memref<1x96xf32, #tpu.memory_space<vmem>>, vector<1x96xf32>
    %53 = vector.broadcast %52 : vector<1x96xf32> to vector<16x96xf32>
    %54 = arith.addf %51, %53 : vector<16x96xf32>
    %c0_6 = arith.constant 0 : index
    %c0_7 = arith.constant 0 : index
    %55 = vector.load %arg2[%c0_6, %c0_7] : memref<32x96xf32, #tpu.memory_space<vmem>>, vector<32x96xf32>
    %c0_8 = arith.constant 0 : index
    %c0_9 = arith.constant 0 : index
    %56 = vector.load %arg4[%c0_8, %c0_9] : memref<1x96xf32, #tpu.memory_space<vmem>>, vector<1x96xf32>
    %cst_10 = arith.constant 0.000000e+00 : f32
    %57 = vector.broadcast %cst_10 : f32 to vector<2x32xf32>
    %cst_11 = arith.constant dense<0.000000e+00> : vector<2x96xf32>
    %58 = tpu.matmul %57, %55, %cst_11 {dimension_numbers = #tpu.dot_dimension_numbers<[1], [0], [0], [1], [0, 0, 1, 1], [], []>} : vector<2x32xf32>, vector<32x96xf32>, vector<2x96xf32> -> vector<2x96xf32>
    %59 = vector.broadcast %56 : vector<1x96xf32> to vector<2x96xf32>
    %60 = arith.addf %58, %59 : vector<2x96xf32>
    %61 = vector.extract_strided_slice %54 {offsets = [0, 0], sizes = [2, 96], strides = [1, 1]} : vector<16x96xf32> to vector<2x96xf32>
    %62 = vector.extract_strided_slice %61 {offsets = [0, 0], sizes = [2, 32], strides = [1, 1]} : vector<2x96xf32> to vector<2x32xf32>
    %63 = vector.extract_strided_slice %60 {offsets = [0, 0], sizes = [2, 32], strides = [1, 1]} : vector<2x96xf32> to vector<2x32xf32>
    %64 = arith.addf %62, %63 : vector<2x32xf32>
    %65 = arith.negf %64 : vector<2x32xf32>
    %66 = math.exp %65 : vector<2x32xf32>
    %cst_12 = arith.constant 1.000000e+00 : f32
    %67 = vector.broadcast %cst_12 : f32 to vector<2x32xf32>
    %68 = arith.addf %67, %66 : vector<2x32xf32>
    %69 = arith.divf %67, %68 : vector<2x32xf32>
    %70 = vector.extract_strided_slice %61 {offsets = [0, 32], sizes = [2, 32], strides = [1, 1]} : vector<2x96xf32> to vector<2x32xf32>
    %71 = vector.extract_strided_slice %60 {offsets = [0, 32], sizes = [2, 32], strides = [1, 1]} : vector<2x96xf32> to vector<2x32xf32>
    %72 = arith.addf %70, %71 : vector<2x32xf32>
    %73 = arith.negf %72 : vector<2x32xf32>
    %74 = math.exp %73 : vector<2x32xf32>
    %cst_13 = arith.constant 1.000000e+00 : f32
    %75 = vector.broadcast %cst_13 : f32 to vector<2x32xf32>
    %76 = arith.addf %75, %74 : vector<2x32xf32>
    %77 = arith.divf %75, %76 : vector<2x32xf32>
    %78 = vector.extract_strided_slice %61 {offsets = [0, 64], sizes = [2, 32], strides = [1, 1]} : vector<2x96xf32> to vector<2x32xf32>
    %79 = vector.extract_strided_slice %60 {offsets = [0, 64], sizes = [2, 32], strides = [1, 1]} : vector<2x96xf32> to vector<2x32xf32>
    %80 = arith.mulf %69, %79 : vector<2x32xf32>
    %81 = arith.addf %78, %80 : vector<2x32xf32>
    %82 = math.tanh %81 : vector<2x32xf32>
    %cst_14 = arith.constant 1.000000e+00 : f32
    %83 = vector.broadcast %cst_14 : f32 to vector<2x32xf32>
    %84 = arith.subf %83, %77 : vector<2x32xf32>
    %85 = arith.mulf %84, %82 : vector<2x32xf32>
    %86 = arith.mulf %77, %57 : vector<2x32xf32>
    %87 = arith.addf %85, %86 : vector<2x32xf32>
    %cst_15 = arith.constant dense<0.000000e+00> : vector<2x96xf32>
    %88 = tpu.matmul %87, %55, %cst_15 {dimension_numbers = #tpu.dot_dimension_numbers<[1], [0], [0], [1], [0, 0, 1, 1], [], []>} : vector<2x32xf32>, vector<32x96xf32>, vector<2x96xf32> -> vector<2x96xf32>
    %89 = vector.broadcast %56 : vector<1x96xf32> to vector<2x96xf32>
    %90 = arith.addf %88, %89 : vector<2x96xf32>
    %91 = vector.extract_strided_slice %54 {offsets = [2, 0], sizes = [2, 96], strides = [1, 1]} : vector<16x96xf32> to vector<2x96xf32>
    %92 = vector.extract_strided_slice %91 {offsets = [0, 0], sizes = [2, 32], strides = [1, 1]} : vector<2x96xf32> to vector<2x32xf32>
    %93 = vector.extract_strided_slice %90 {offsets = [0, 0], sizes = [2, 32], strides = [1, 1]} : vector<2x96xf32> to vector<2x32xf32>
    %94 = arith.addf %92, %93 : vector<2x32xf32>
    %95 = arith.negf %94 : vector<2x32xf32>
    %96 = math.exp %95 : vector<2x32xf32>
    %cst_16 = arith.constant 1.000000e+00 : f32
    %97 = vector.broadcast %cst_16 : f32 to vector<2x32xf32>
    %98 = arith.addf %97, %96 : vector<2x32xf32>
    %99 = arith.divf %97, %98 : vector<2x32xf32>
    %100 = vector.extract_strided_slice %91 {offsets = [0, 32], sizes = [2, 32], strides = [1, 1]} : vector<2x96xf32> to vector<2x32xf32>
    %101 = vector.extract_strided_slice %90 {offsets = [0, 32], sizes = [2, 32], strides = [1, 1]} : vector<2x96xf32> to vector<2x32xf32>
    %102 = arith.addf %100, %101 : vector<2x32xf32>
    %103 = arith.negf %102 : vector<2x32xf32>
    %104 = math.exp %103 : vector<2x32xf32>
    %cst_17 = arith.constant 1.000000e+00 : f32
    %105 = vector.broadcast %cst_17 : f32 to vector<2x32xf32>
    %106 = arith.addf %105, %104 : vector<2x32xf32>
    %107 = arith.divf %105, %106 : vector<2x32xf32>
    %108 = vector.extract_strided_slice %91 {offsets = [0, 64], sizes = [2, 32], strides = [1, 1]} : vector<2x96xf32> to vector<2x32xf32>
    %109 = vector.extract_strided_slice %90 {offsets = [0, 64], sizes = [2, 32], strides = [1, 1]} : vector<2x96xf32> to vector<2x32xf32>
    %110 = arith.mulf %99, %109 : vector<2x32xf32>
    %111 = arith.addf %108, %110 : vector<2x32xf32>
    %112 = math.tanh %111 : vector<2x32xf32>
    %cst_18 = arith.constant 1.000000e+00 : f32
    %113 = vector.broadcast %cst_18 : f32 to vector<2x32xf32>
    %114 = arith.subf %113, %107 : vector<2x32xf32>
    %115 = arith.mulf %114, %112 : vector<2x32xf32>
    %116 = arith.mulf %107, %87 : vector<2x32xf32>
    %117 = arith.addf %115, %116 : vector<2x32xf32>
    %cst_19 = arith.constant dense<0.000000e+00> : vector<2x96xf32>
    %118 = tpu.matmul %117, %55, %cst_19 {dimension_numbers = #tpu.dot_dimension_numbers<[1], [0], [0], [1], [0, 0, 1, 1], [], []>} : vector<2x32xf32>, vector<32x96xf32>, vector<2x96xf32> -> vector<2x96xf32>
    %119 = vector.broadcast %56 : vector<1x96xf32> to vector<2x96xf32>
    %120 = arith.addf %118, %119 : vector<2x96xf32>
    %121 = vector.extract_strided_slice %54 {offsets = [4, 0], sizes = [2, 96], strides = [1, 1]} : vector<16x96xf32> to vector<2x96xf32>
    %122 = vector.extract_strided_slice %121 {offsets = [0, 0], sizes = [2, 32], strides = [1, 1]} : vector<2x96xf32> to vector<2x32xf32>
    %123 = vector.extract_strided_slice %120 {offsets = [0, 0], sizes = [2, 32], strides = [1, 1]} : vector<2x96xf32> to vector<2x32xf32>
    %124 = arith.addf %122, %123 : vector<2x32xf32>
    %125 = arith.negf %124 : vector<2x32xf32>
    %126 = math.exp %125 : vector<2x32xf32>
    %cst_20 = arith.constant 1.000000e+00 : f32
    %127 = vector.broadcast %cst_20 : f32 to vector<2x32xf32>
    %128 = arith.addf %127, %126 : vector<2x32xf32>
    %129 = arith.divf %127, %128 : vector<2x32xf32>
    %130 = vector.extract_strided_slice %121 {offsets = [0, 32], sizes = [2, 32], strides = [1, 1]} : vector<2x96xf32> to vector<2x32xf32>
    %131 = vector.extract_strided_slice %120 {offsets = [0, 32], sizes = [2, 32], strides = [1, 1]} : vector<2x96xf32> to vector<2x32xf32>
    %132 = arith.addf %130, %131 : vector<2x32xf32>
    %133 = arith.negf %132 : vector<2x32xf32>
    %134 = math.exp %133 : vector<2x32xf32>
    %cst_21 = arith.constant 1.000000e+00 : f32
    %135 = vector.broadcast %cst_21 : f32 to vector<2x32xf32>
    %136 = arith.addf %135, %134 : vector<2x32xf32>
    %137 = arith.divf %135, %136 : vector<2x32xf32>
    %138 = vector.extract_strided_slice %121 {offsets = [0, 64], sizes = [2, 32], strides = [1, 1]} : vector<2x96xf32> to vector<2x32xf32>
    %139 = vector.extract_strided_slice %120 {offsets = [0, 64], sizes = [2, 32], strides = [1, 1]} : vector<2x96xf32> to vector<2x32xf32>
    %140 = arith.mulf %129, %139 : vector<2x32xf32>
    %141 = arith.addf %138, %140 : vector<2x32xf32>
    %142 = math.tanh %141 : vector<2x32xf32>
    %cst_22 = arith.constant 1.000000e+00 : f32
    %143 = vector.broadcast %cst_22 : f32 to vector<2x32xf32>
    %144 = arith.subf %143, %137 : vector<2x32xf32>
    %145 = arith.mulf %144, %142 : vector<2x32xf32>
    %146 = arith.mulf %137, %117 : vector<2x32xf32>
    %147 = arith.addf %145, %146 : vector<2x32xf32>
    %cst_23 = arith.constant dense<0.000000e+00> : vector<2x96xf32>
    %148 = tpu.matmul %147, %55, %cst_23 {dimension_numbers = #tpu.dot_dimension_numbers<[1], [0], [0], [1], [0, 0, 1, 1], [], []>} : vector<2x32xf32>, vector<32x96xf32>, vector<2x96xf32> -> vector<2x96xf32>
    %149 = vector.broadcast %56 : vector<1x96xf32> to vector<2x96xf32>
    %150 = arith.addf %148, %149 : vector<2x96xf32>
    %151 = vector.extract_strided_slice %54 {offsets = [6, 0], sizes = [2, 96], strides = [1, 1]} : vector<16x96xf32> to vector<2x96xf32>
    %152 = vector.extract_strided_slice %151 {offsets = [0, 0], sizes = [2, 32], strides = [1, 1]} : vector<2x96xf32> to vector<2x32xf32>
    %153 = vector.extract_strided_slice %150 {offsets = [0, 0], sizes = [2, 32], strides = [1, 1]} : vector<2x96xf32> to vector<2x32xf32>
    %154 = arith.addf %152, %153 : vector<2x32xf32>
    %155 = arith.negf %154 : vector<2x32xf32>
    %156 = math.exp %155 : vector<2x32xf32>
    %cst_24 = arith.constant 1.000000e+00 : f32
    %157 = vector.broadcast %cst_24 : f32 to vector<2x32xf32>
    %158 = arith.addf %157, %156 : vector<2x32xf32>
    %159 = arith.divf %157, %158 : vector<2x32xf32>
    %160 = vector.extract_strided_slice %151 {offsets = [0, 32], sizes = [2, 32], strides = [1, 1]} : vector<2x96xf32> to vector<2x32xf32>
    %161 = vector.extract_strided_slice %150 {offsets = [0, 32], sizes = [2, 32], strides = [1, 1]} : vector<2x96xf32> to vector<2x32xf32>
    %162 = arith.addf %160, %161 : vector<2x32xf32>
    %163 = arith.negf %162 : vector<2x32xf32>
    %164 = math.exp %163 : vector<2x32xf32>
    %cst_25 = arith.constant 1.000000e+00 : f32
    %165 = vector.broadcast %cst_25 : f32 to vector<2x32xf32>
    %166 = arith.addf %165, %164 : vector<2x32xf32>
    %167 = arith.divf %165, %166 : vector<2x32xf32>
    %168 = vector.extract_strided_slice %151 {offsets = [0, 64], sizes = [2, 32], strides = [1, 1]} : vector<2x96xf32> to vector<2x32xf32>
    %169 = vector.extract_strided_slice %150 {offsets = [0, 64], sizes = [2, 32], strides = [1, 1]} : vector<2x96xf32> to vector<2x32xf32>
    %170 = arith.mulf %159, %169 : vector<2x32xf32>
    %171 = arith.addf %168, %170 : vector<2x32xf32>
    %172 = math.tanh %171 : vector<2x32xf32>
    %cst_26 = arith.constant 1.000000e+00 : f32
    %173 = vector.broadcast %cst_26 : f32 to vector<2x32xf32>
    %174 = arith.subf %173, %167 : vector<2x32xf32>
    %175 = arith.mulf %174, %172 : vector<2x32xf32>
    %176 = arith.mulf %167, %147 : vector<2x32xf32>
    %177 = arith.addf %175, %176 : vector<2x32xf32>
    %cst_27 = arith.constant dense<0.000000e+00> : vector<2x96xf32>
    %178 = tpu.matmul %177, %55, %cst_27 {dimension_numbers = #tpu.dot_dimension_numbers<[1], [0], [0], [1], [0, 0, 1, 1], [], []>} : vector<2x32xf32>, vector<32x96xf32>, vector<2x96xf32> -> vector<2x96xf32>
    %179 = vector.broadcast %56 : vector<1x96xf32> to vector<2x96xf32>
    %180 = arith.addf %178, %179 : vector<2x96xf32>
    %181 = vector.extract_strided_slice %54 {offsets = [8, 0], sizes = [2, 96], strides = [1, 1]} : vector<16x96xf32> to vector<2x96xf32>
    %182 = vector.extract_strided_slice %181 {offsets = [0, 0], sizes = [2, 32], strides = [1, 1]} : vector<2x96xf32> to vector<2x32xf32>
    %183 = vector.extract_strided_slice %180 {offsets = [0, 0], sizes = [2, 32], strides = [1, 1]} : vector<2x96xf32> to vector<2x32xf32>
    %184 = arith.addf %182, %183 : vector<2x32xf32>
    %185 = arith.negf %184 : vector<2x32xf32>
    %186 = math.exp %185 : vector<2x32xf32>
    %cst_28 = arith.constant 1.000000e+00 : f32
    %187 = vector.broadcast %cst_28 : f32 to vector<2x32xf32>
    %188 = arith.addf %187, %186 : vector<2x32xf32>
    %189 = arith.divf %187, %188 : vector<2x32xf32>
    %190 = vector.extract_strided_slice %181 {offsets = [0, 32], sizes = [2, 32], strides = [1, 1]} : vector<2x96xf32> to vector<2x32xf32>
    %191 = vector.extract_strided_slice %180 {offsets = [0, 32], sizes = [2, 32], strides = [1, 1]} : vector<2x96xf32> to vector<2x32xf32>
    %192 = arith.addf %190, %191 : vector<2x32xf32>
    %193 = arith.negf %192 : vector<2x32xf32>
    %194 = math.exp %193 : vector<2x32xf32>
    %cst_29 = arith.constant 1.000000e+00 : f32
    %195 = vector.broadcast %cst_29 : f32 to vector<2x32xf32>
    %196 = arith.addf %195, %194 : vector<2x32xf32>
    %197 = arith.divf %195, %196 : vector<2x32xf32>
    %198 = vector.extract_strided_slice %181 {offsets = [0, 64], sizes = [2, 32], strides = [1, 1]} : vector<2x96xf32> to vector<2x32xf32>
    %199 = vector.extract_strided_slice %180 {offsets = [0, 64], sizes = [2, 32], strides = [1, 1]} : vector<2x96xf32> to vector<2x32xf32>
    %200 = arith.mulf %189, %199 : vector<2x32xf32>
    %201 = arith.addf %198, %200 : vector<2x32xf32>
    %202 = math.tanh %201 : vector<2x32xf32>
    %cst_30 = arith.constant 1.000000e+00 : f32
    %203 = vector.broadcast %cst_30 : f32 to vector<2x32xf32>
    %204 = arith.subf %203, %197 : vector<2x32xf32>
    %205 = arith.mulf %204, %202 : vector<2x32xf32>
    %206 = arith.mulf %197, %177 : vector<2x32xf32>
    %207 = arith.addf %205, %206 : vector<2x32xf32>
    %cst_31 = arith.constant dense<0.000000e+00> : vector<2x96xf32>
    %208 = tpu.matmul %207, %55, %cst_31 {dimension_numbers = #tpu.dot_dimension_numbers<[1], [0], [0], [1], [0, 0, 1, 1], [], []>} : vector<2x32xf32>, vector<32x96xf32>, vector<2x96xf32> -> vector<2x96xf32>
    %209 = vector.broadcast %56 : vector<1x96xf32> to vector<2x96xf32>
    %210 = arith.addf %208, %209 : vector<2x96xf32>
    %211 = vector.extract_strided_slice %54 {offsets = [10, 0], sizes = [2, 96], strides = [1, 1]} : vector<16x96xf32> to vector<2x96xf32>
    %212 = vector.extract_strided_slice %211 {offsets = [0, 0], sizes = [2, 32], strides = [1, 1]} : vector<2x96xf32> to vector<2x32xf32>
    %213 = vector.extract_strided_slice %210 {offsets = [0, 0], sizes = [2, 32], strides = [1, 1]} : vector<2x96xf32> to vector<2x32xf32>
    %214 = arith.addf %212, %213 : vector<2x32xf32>
    %215 = arith.negf %214 : vector<2x32xf32>
    %216 = math.exp %215 : vector<2x32xf32>
    %cst_32 = arith.constant 1.000000e+00 : f32
    %217 = vector.broadcast %cst_32 : f32 to vector<2x32xf32>
    %218 = arith.addf %217, %216 : vector<2x32xf32>
    %219 = arith.divf %217, %218 : vector<2x32xf32>
    %220 = vector.extract_strided_slice %211 {offsets = [0, 32], sizes = [2, 32], strides = [1, 1]} : vector<2x96xf32> to vector<2x32xf32>
    %221 = vector.extract_strided_slice %210 {offsets = [0, 32], sizes = [2, 32], strides = [1, 1]} : vector<2x96xf32> to vector<2x32xf32>
    %222 = arith.addf %220, %221 : vector<2x32xf32>
    %223 = arith.negf %222 : vector<2x32xf32>
    %224 = math.exp %223 : vector<2x32xf32>
    %cst_33 = arith.constant 1.000000e+00 : f32
    %225 = vector.broadcast %cst_33 : f32 to vector<2x32xf32>
    %226 = arith.addf %225, %224 : vector<2x32xf32>
    %227 = arith.divf %225, %226 : vector<2x32xf32>
    %228 = vector.extract_strided_slice %211 {offsets = [0, 64], sizes = [2, 32], strides = [1, 1]} : vector<2x96xf32> to vector<2x32xf32>
    %229 = vector.extract_strided_slice %210 {offsets = [0, 64], sizes = [2, 32], strides = [1, 1]} : vector<2x96xf32> to vector<2x32xf32>
    %230 = arith.mulf %219, %229 : vector<2x32xf32>
    %231 = arith.addf %228, %230 : vector<2x32xf32>
    %232 = math.tanh %231 : vector<2x32xf32>
    %cst_34 = arith.constant 1.000000e+00 : f32
    %233 = vector.broadcast %cst_34 : f32 to vector<2x32xf32>
    %234 = arith.subf %233, %227 : vector<2x32xf32>
    %235 = arith.mulf %234, %232 : vector<2x32xf32>
    %236 = arith.mulf %227, %207 : vector<2x32xf32>
    %237 = arith.addf %235, %236 : vector<2x32xf32>
    %cst_35 = arith.constant dense<0.000000e+00> : vector<2x96xf32>
    %238 = tpu.matmul %237, %55, %cst_35 {dimension_numbers = #tpu.dot_dimension_numbers<[1], [0], [0], [1], [0, 0, 1, 1], [], []>} : vector<2x32xf32>, vector<32x96xf32>, vector<2x96xf32> -> vector<2x96xf32>
    %239 = vector.broadcast %56 : vector<1x96xf32> to vector<2x96xf32>
    %240 = arith.addf %238, %239 : vector<2x96xf32>
    %241 = vector.extract_strided_slice %54 {offsets = [12, 0], sizes = [2, 96], strides = [1, 1]} : vector<16x96xf32> to vector<2x96xf32>
    %242 = vector.extract_strided_slice %241 {offsets = [0, 0], sizes = [2, 32], strides = [1, 1]} : vector<2x96xf32> to vector<2x32xf32>
    %243 = vector.extract_strided_slice %240 {offsets = [0, 0], sizes = [2, 32], strides = [1, 1]} : vector<2x96xf32> to vector<2x32xf32>
    %244 = arith.addf %242, %243 : vector<2x32xf32>
    %245 = arith.negf %244 : vector<2x32xf32>
    %246 = math.exp %245 : vector<2x32xf32>
    %cst_36 = arith.constant 1.000000e+00 : f32
    %247 = vector.broadcast %cst_36 : f32 to vector<2x32xf32>
    %248 = arith.addf %247, %246 : vector<2x32xf32>
    %249 = arith.divf %247, %248 : vector<2x32xf32>
    %250 = vector.extract_strided_slice %241 {offsets = [0, 32], sizes = [2, 32], strides = [1, 1]} : vector<2x96xf32> to vector<2x32xf32>
    %251 = vector.extract_strided_slice %240 {offsets = [0, 32], sizes = [2, 32], strides = [1, 1]} : vector<2x96xf32> to vector<2x32xf32>
    %252 = arith.addf %250, %251 : vector<2x32xf32>
    %253 = arith.negf %252 : vector<2x32xf32>
    %254 = math.exp %253 : vector<2x32xf32>
    %cst_37 = arith.constant 1.000000e+00 : f32
    %255 = vector.broadcast %cst_37 : f32 to vector<2x32xf32>
    %256 = arith.addf %255, %254 : vector<2x32xf32>
    %257 = arith.divf %255, %256 : vector<2x32xf32>
    %258 = vector.extract_strided_slice %241 {offsets = [0, 64], sizes = [2, 32], strides = [1, 1]} : vector<2x96xf32> to vector<2x32xf32>
    %259 = vector.extract_strided_slice %240 {offsets = [0, 64], sizes = [2, 32], strides = [1, 1]} : vector<2x96xf32> to vector<2x32xf32>
    %260 = arith.mulf %249, %259 : vector<2x32xf32>
    %261 = arith.addf %258, %260 : vector<2x32xf32>
    %262 = math.tanh %261 : vector<2x32xf32>
    %cst_38 = arith.constant 1.000000e+00 : f32
    %263 = vector.broadcast %cst_38 : f32 to vector<2x32xf32>
    %264 = arith.subf %263, %257 : vector<2x32xf32>
    %265 = arith.mulf %264, %262 : vector<2x32xf32>
    %266 = arith.mulf %257, %237 : vector<2x32xf32>
    %267 = arith.addf %265, %266 : vector<2x32xf32>
    %cst_39 = arith.constant dense<0.000000e+00> : vector<2x96xf32>
    %268 = tpu.matmul %267, %55, %cst_39 {dimension_numbers = #tpu.dot_dimension_numbers<[1], [0], [0], [1], [0, 0, 1, 1], [], []>} : vector<2x32xf32>, vector<32x96xf32>, vector<2x96xf32> -> vector<2x96xf32>
    %269 = vector.broadcast %56 : vector<1x96xf32> to vector<2x96xf32>
    %270 = arith.addf %268, %269 : vector<2x96xf32>
    %271 = vector.extract_strided_slice %54 {offsets = [14, 0], sizes = [2, 96], strides = [1, 1]} : vector<16x96xf32> to vector<2x96xf32>
    %272 = vector.extract_strided_slice %271 {offsets = [0, 0], sizes = [2, 32], strides = [1, 1]} : vector<2x96xf32> to vector<2x32xf32>
    %273 = vector.extract_strided_slice %270 {offsets = [0, 0], sizes = [2, 32], strides = [1, 1]} : vector<2x96xf32> to vector<2x32xf32>
    %274 = arith.addf %272, %273 : vector<2x32xf32>
    %275 = arith.negf %274 : vector<2x32xf32>
    %276 = math.exp %275 : vector<2x32xf32>
    %cst_40 = arith.constant 1.000000e+00 : f32
    %277 = vector.broadcast %cst_40 : f32 to vector<2x32xf32>
    %278 = arith.addf %277, %276 : vector<2x32xf32>
    %279 = arith.divf %277, %278 : vector<2x32xf32>
    %280 = vector.extract_strided_slice %271 {offsets = [0, 32], sizes = [2, 32], strides = [1, 1]} : vector<2x96xf32> to vector<2x32xf32>
    %281 = vector.extract_strided_slice %270 {offsets = [0, 32], sizes = [2, 32], strides = [1, 1]} : vector<2x96xf32> to vector<2x32xf32>
    %282 = arith.addf %280, %281 : vector<2x32xf32>
    %283 = arith.negf %282 : vector<2x32xf32>
    %284 = math.exp %283 : vector<2x32xf32>
    %cst_41 = arith.constant 1.000000e+00 : f32
    %285 = vector.broadcast %cst_41 : f32 to vector<2x32xf32>
    %286 = arith.addf %285, %284 : vector<2x32xf32>
    %287 = arith.divf %285, %286 : vector<2x32xf32>
    %288 = vector.extract_strided_slice %271 {offsets = [0, 64], sizes = [2, 32], strides = [1, 1]} : vector<2x96xf32> to vector<2x32xf32>
    %289 = vector.extract_strided_slice %270 {offsets = [0, 64], sizes = [2, 32], strides = [1, 1]} : vector<2x96xf32> to vector<2x32xf32>
    %290 = arith.mulf %279, %289 : vector<2x32xf32>
    %291 = arith.addf %288, %290 : vector<2x32xf32>
    %292 = math.tanh %291 : vector<2x32xf32>
    %cst_42 = arith.constant 1.000000e+00 : f32
    %293 = vector.broadcast %cst_42 : f32 to vector<2x32xf32>
    %294 = arith.subf %293, %287 : vector<2x32xf32>
    %295 = arith.mulf %294, %292 : vector<2x32xf32>
    %296 = arith.mulf %287, %267 : vector<2x32xf32>
    %297 = arith.addf %295, %296 : vector<2x32xf32>
    %298 = tpu.concatenate %87, %117, %147, %177, %207, %237, %267, %297 in 0 : vector<2x32xf32>, vector<2x32xf32>, vector<2x32xf32>, vector<2x32xf32>, vector<2x32xf32>, vector<2x32xf32>, vector<2x32xf32>, vector<2x32xf32> -> vector<16x32xf32>
    %c0_43 = arith.constant 0 : index
    %c0_44 = arith.constant 0 : index
    %299 = vector.load %arg5[%c0_43, %c0_44] : memref<32x128xf32, #tpu.memory_space<vmem>>, vector<32x128xf32>
    %cst_45 = arith.constant dense<0.000000e+00> : vector<16x128xf32>
    %300 = tpu.matmul %298, %299, %cst_45 {dimension_numbers = #tpu.dot_dimension_numbers<[1], [0], [0], [1], [0, 0, 1, 1], [], []>} : vector<16x32xf32>, vector<32x128xf32>, vector<16x128xf32> -> vector<16x128xf32>
    %c0_46 = arith.constant 0 : index
    %c0_47 = arith.constant 0 : index
    %301 = vector.load %arg6[%c0_46, %c0_47] : memref<1x128xf32, #tpu.memory_space<vmem>>, vector<1x128xf32>
    %302 = vector.broadcast %301 : vector<1x128xf32> to vector<16x128xf32>
    %303 = arith.addf %300, %302 : vector<16x128xf32>
    %cst_48 = arith.constant 0.000000e+00 : f32
    %304 = vector.broadcast %cst_48 : f32 to vector<16x128xf32>
    %305 = arith.maximumf %303, %304 : vector<16x128xf32>
    %c0_49 = arith.constant 0 : index
    %c0_50 = arith.constant 0 : index
    %306 = vector.load %arg7[%c0_49, %c0_50] : memref<128x2xf32, #tpu.memory_space<vmem>>, vector<128x2xf32>
    %cst_51 = arith.constant dense<0.000000e+00> : vector<16x2xf32>
    %307 = tpu.matmul %305, %306, %cst_51 {dimension_numbers = #tpu.dot_dimension_numbers<[1], [0], [0], [1], [0, 0, 1, 1], [], []>} : vector<16x128xf32>, vector<128x2xf32>, vector<16x2xf32> -> vector<16x2xf32>
    %c0_52 = arith.constant 0 : index
    %c0_53 = arith.constant 0 : index
    %308 = vector.load %arg8[%c0_52, %c0_53] : memref<1x2xf32, #tpu.memory_space<vmem>>, vector<1x2xf32>
    %309 = vector.broadcast %308 : vector<1x2xf32> to vector<16x2xf32>
    %310 = arith.addf %307, %309 : vector<16x2xf32>
    %311 = vector.extract_strided_slice %310 {offsets = [0, 0], sizes = [1, 2], strides = [1, 1]} : vector<16x2xf32> to vector<1x2xf32>
    %312 = vector.extract_strided_slice %310 {offsets = [2, 0], sizes = [1, 2], strides = [1, 1]} : vector<16x2xf32> to vector<1x2xf32>
    %313 = vector.extract_strided_slice %310 {offsets = [4, 0], sizes = [1, 2], strides = [1, 1]} : vector<16x2xf32> to vector<1x2xf32>
    %314 = vector.extract_strided_slice %310 {offsets = [6, 0], sizes = [1, 2], strides = [1, 1]} : vector<16x2xf32> to vector<1x2xf32>
    %315 = vector.extract_strided_slice %310 {offsets = [8, 0], sizes = [1, 2], strides = [1, 1]} : vector<16x2xf32> to vector<1x2xf32>
    %316 = vector.extract_strided_slice %310 {offsets = [10, 0], sizes = [1, 2], strides = [1, 1]} : vector<16x2xf32> to vector<1x2xf32>
    %317 = vector.extract_strided_slice %310 {offsets = [12, 0], sizes = [1, 2], strides = [1, 1]} : vector<16x2xf32> to vector<1x2xf32>
    %318 = vector.extract_strided_slice %310 {offsets = [14, 0], sizes = [1, 2], strides = [1, 1]} : vector<16x2xf32> to vector<1x2xf32>
    %319 = tpu.concatenate %311, %312, %313, %314, %315, %316, %317, %318 in 0 : vector<1x2xf32>, vector<1x2xf32>, vector<1x2xf32>, vector<1x2xf32>, vector<1x2xf32>, vector<1x2xf32>, vector<1x2xf32>, vector<1x2xf32> -> vector<8x2xf32>
    %320 = vector.extract_strided_slice %310 {offsets = [1, 0], sizes = [1, 2], strides = [1, 1]} : vector<16x2xf32> to vector<1x2xf32>
    %321 = vector.extract_strided_slice %310 {offsets = [3, 0], sizes = [1, 2], strides = [1, 1]} : vector<16x2xf32> to vector<1x2xf32>
    %322 = vector.extract_strided_slice %310 {offsets = [5, 0], sizes = [1, 2], strides = [1, 1]} : vector<16x2xf32> to vector<1x2xf32>
    %323 = vector.extract_strided_slice %310 {offsets = [7, 0], sizes = [1, 2], strides = [1, 1]} : vector<16x2xf32> to vector<1x2xf32>
    %324 = vector.extract_strided_slice %310 {offsets = [9, 0], sizes = [1, 2], strides = [1, 1]} : vector<16x2xf32> to vector<1x2xf32>
    %325 = vector.extract_strided_slice %310 {offsets = [11, 0], sizes = [1, 2], strides = [1, 1]} : vector<16x2xf32> to vector<1x2xf32>
    %326 = vector.extract_strided_slice %310 {offsets = [13, 0], sizes = [1, 2], strides = [1, 1]} : vector<16x2xf32> to vector<1x2xf32>
    %327 = vector.extract_strided_slice %310 {offsets = [15, 0], sizes = [1, 2], strides = [1, 1]} : vector<16x2xf32> to vector<1x2xf32>
    %328 = tpu.concatenate %320, %321, %322, %323, %324, %325, %326, %327 in 0 : vector<1x2xf32>, vector<1x2xf32>, vector<1x2xf32>, vector<1x2xf32>, vector<1x2xf32>, vector<1x2xf32>, vector<1x2xf32>, vector<1x2xf32> -> vector<8x2xf32>
    %329 = arith.maximumf %319, %328 : vector<8x2xf32>
    %330 = arith.subf %319, %329 : vector<8x2xf32>
    %331 = math.exp %330 : vector<8x2xf32>
    %332 = arith.subf %328, %329 : vector<8x2xf32>
    %333 = math.exp %332 : vector<8x2xf32>
    %334 = arith.addf %331, %333 : vector<8x2xf32>
    %335 = math.log %334 : vector<8x2xf32>
    %336 = arith.addf %329, %335 : vector<8x2xf32>
    %337 = arith.subf %319, %336 : vector<8x2xf32>
    %338 = arith.subf %328, %336 : vector<8x2xf32>
    %339 = tpu.concatenate %337, %338 in 0 : vector<8x2xf32>, vector<8x2xf32> -> vector<16x2xf32>
    %c0_54 = arith.constant 0 : index
    %c0_55 = arith.constant 0 : index
    %340 = vector.load %arg9[%c0_54, %c0_55] : memref<16x2xf32, #tpu.memory_space<vmem>>, vector<16x2xf32>
    tpu.vector_store %arg9[%c0_54, %c0_55], %339 {strides = array<i32>} : memref<16x2xf32, #tpu.memory_space<vmem>>, vector<16x2xf32>,
    return
  }
}

</mosaic_0001>

<llo_original>
// kernel: diagnostic_classifier_forward.1
$region0: #{diagnostic_classifier_forward.1}
  #allocation0 [shape = 'u32[]', space=smem, size = 0x4, offset = 0x4, fixed_abs, tag = 'smem constant byte address 0x4 - core index']
  #allocation1 [shape = 'u32[144,128]{1,0:T(1,128)}', space=vmem, size = 0x12000, scoped, tag = 'internal scratch']
  %s0 = inlined_call_operand.vmem [shape: f32[2,8,32], index: 0, kind: input, shape index: {}]
  %s1 = inlined_call_operand.vmem [shape: f32[32,96], index: 1, kind: input, shape index: {}]
  %s2 = inlined_call_operand.vmem [shape: f32[32,96], index: 2, kind: input, shape index: {}]
  %s3 = inlined_call_operand.vmem [shape: f32[1,96], index: 3, kind: input, shape index: {}]
  %s4 = inlined_call_operand.vmem [shape: f32[1,96], index: 4, kind: input, shape index: {}]
  %s5 = inlined_call_operand.vmem [shape: f32[32,128], index: 5, kind: input, shape index: {}]
  %s6 = inlined_call_operand.vmem [shape: f32[1,128], index: 6, kind: input, shape index: {}]
  %s7 = inlined_call_operand.vmem [shape: f32[128,2], index: 7, kind: input, shape index: {}]
  %s8 = inlined_call_operand.vmem [shape: f32[1,2], index: 8, kind: input, shape index: {}]
  %s9 = inlined_call_operand.vmem [shape: f32[16,2], index: 9, kind: output, shape index: {}]
  %s10 = sld [smem:[#allocation0]]
  $region46: #{diagnostic_classifier_forward.1} parent=0
    _
  %s12 = ssub.s32 1, %s10
  %s13 = scalar_select 0, %s12, %s10
  // Predicated region
  $region2: #{diagnostic_classifier_forward.1} parent=0 // pred_check
    _
  $region3: #{diagnostic_classifier_forward.1} parent=0 // pred_check_branch
    %15 = sbr.rel (0) target = $region5
  $region4: #{diagnostic_classifier_forward.1} parent=0 // pred_region
    _
  $region5: #{diagnostic_classifier_forward.1} parent=0 // pred_fallthru
    _
  // Predicated region
  $region6: #{diagnostic_classifier_forward.1} parent=0 // pred_check
    _
  $region7: #{diagnostic_classifier_forward.1} parent=0 // pred_check_branch
    %17 = sbr.rel (0) target = $region9
  $region8: #{diagnostic_classifier_forward.1} parent=0 // pred_region
    _
  $region9: #{diagnostic_classifier_forward.1} parent=0 // pred_fallthru
    _
  // Predicated region
  $region10: #{diagnostic_classifier_forward.1} parent=0 // pred_check
    _
  $region11: #{diagnostic_classifier_forward.1} parent=0 // pred_check_branch
    %19 = sbr.rel (0) target = $region13
  $region12: #{diagnostic_classifier_forward.1} parent=0 // pred_region
    _
  $region13: #{diagnostic_classifier_forward.1} parent=0 // pred_fallthru
    _
  // Predicated region
  $region14: #{diagnostic_classifier_forward.1} parent=0 // pred_check
    _
  $region15: #{diagnostic_classifier_forward.1} parent=0 // pred_check_branch
    %21 = sbr.rel (0) target = $region17
  $region16: #{diagnostic_classifier_forward.1} parent=0 // pred_region
    _
  $region17: #{diagnostic_classifier_forward.1} parent=0 // pred_fallthru
    _
  // Predicated region
  $region18: #{diagnostic_classifier_forward.1} parent=0 // pred_check
    _
  $region19: #{diagnostic_classifier_forward.1} parent=0 // pred_check_branch
    %23 = sbr.rel (0) target = $region21
  $region20: #{diagnostic_classifier_forward.1} parent=0 // pred_region
    _
  $region21: #{diagnostic_classifier_forward.1} parent=0 // pred_fallthru
    _
  // Predicated region
  $region22: #{diagnostic_classifier_forward.1} parent=0 // pred_check
    _
  $region23: #{diagnostic_classifier_forward.1} parent=0 // pred_check_branch
    %25 = sbr.rel (0) target = $region25
  $region24: #{diagnostic_classifier_forward.1} parent=0 // pred_region
    _
  $region25: #{diagnostic_classifier_forward.1} parent=0 // pred_fallthru
    _
  // Predicated region
  $region26: #{diagnostic_classifier_forward.1} parent=0 // pred_check
    _
  $region27: #{diagnostic_classifier_forward.1} parent=0 // pred_check_branch
    %27 = sbr.rel (0) target = $region29
  $region28: #{diagnostic_classifier_forward.1} parent=0 // pred_region
    _
  $region29: #{diagnostic_classifier_forward.1} parent=0 // pred_fallthru
    _
  // Predicated region
  $region30: #{diagnostic_classifier_forward.1} parent=0 // pred_check
    _
  $region31: #{diagnostic_classifier_forward.1} parent=0 // pred_check_branch
    %29 = sbr.rel (0) target = $region33
  $region32: #{diagnostic_classifier_forward.1} parent=0 // pred_region
    _
  $region33: #{diagnostic_classifier_forward.1} parent=0 // pred_fallthru
    _
  // Predicated region
  $region34: #{diagnostic_classifier_forward.1} parent=0 // pred_check
    _
  $region35: #{diagnostic_classifier_forward.1} parent=0 // pred_check_branch
    %31 = sbr.rel (0) target = $region37
  $region36: #{diagnostic_classifier_forward.1} parent=0 // pred_region
    _
  $region37: #{diagnostic_classifier_forward.1} parent=0 // pred_fallthru
    _
  %v32 = vld [vmem:[%s0] sm:$0xff]
  %v33 = vld [vmem:[%s0 + $0x8] sm:$0xff]
  %v35 = vrot.slane %v33, 7
  %v38 = vrot.slane %v32, 7
  %v40 = vrot.slane %v33, 6
  %v42 = vrot.slane %v32, 6
  %v44 = vrot.slane %v33, 5
  %v46 = vrot.slane %v32, 5
  %v48 = vrot.slane %v33, 4
  %v50 = vrot.slane %v32, 4
  %v52 = vrot.slane %v33, 3
  %v54 = vrot.slane %v32, 3
  %v56 = vrot.slane %v33, 2
  %v58 = vrot.slane %v32, 2
  %v60 = vrot.slane %v33, 1
  %v62 = vrot.slane %v32, 1
  %vm64 = vcmask 1040384
  %v65 = vsel %vm64, %v32, %v35
  %vm66 = vcmask 1041408
  %v67 = vsel %vm66, %v65, %v38
  %vm68 = vcmask 1042432
  %v69 = vsel %vm68, %v67, %v40
  %vm70 = vcmask 1043456
  %v71 = vsel %vm70, %v69, %v42
  %vm72 = vcmask 1044480
  %v73 = vsel %vm72, %v71, %v44
  %vm74 = vcmask 1045504
  %v75 = vsel %vm74, %v73, %v46
  %vm76 = vcmask 1046528
  %v77 = vsel %vm76, %v75, %v48
  %v78 = vsel %vm64, %v50, %v52
  %v79 = vsel %vm66, %v78, %v54
  %v80 = vsel %vm68, %v79, %v56
  %v81 = vsel %vm70, %v80, %v58
  %v82 = vsel %vm72, %v81, %v60
  %v83 = vsel %vm74, %v82, %v62
  %v84 = vsel %vm76, %v83, %v33
  %v85 = vld [vmem:[%s1] sm:$0xff]
  %v86 = vld [vmem:[%s1 + $0x8] sm:$0xff]
  %v87 = vld [vmem:[%s1 + $0x10] sm:$0xff]
  %v88 = vld [vmem:[%s1 + $0x18] sm:$0xff]
  %v89 = vld [vmem:[%s3] sm:$0x1]
  %v91 = vlaneseq
  %v92 = vshrl.u32 %v91, 7
  %v93 = vsub.s32 0, %v92
  %v94 = vrot.slane %v89, %v93
  %vm96 = vcmask 261120
  %v98 = vsel %vm96, %v77, 0
  %v101 = vsel %vm96, %v84, 0
  %103 = vmatprep.subr.mxu0 0.0
  %104 = vmatpush1.msra.mxu0 0.0
  %105 = vmatprep.subr.mxu0 0.0
  %106 = vmatpush1.msra.mxu0 0.0
  %107 = vmatprep.subr.mxu0 0.0
  %108 = vmatpush1.msra.mxu0 0.0
  %109 = vmatprep.subr.mxu0 0.0
  %110 = vmatpush1.msra.mxu0 0.0
  %111 = vmatprep.subr.mxu0 0.0
  %112 = vmatpush1.msra.mxu0 0.0
  %113 = vmatprep.subr.mxu0 0.0
  %114 = vmatpush1.msra.mxu0 0.0
  %115 = vmatprep.subr.mxu0 0.0
  %116 = vmatpush1.msra.mxu0 0.0
  %117 = vmatprep.subr.mxu0 0.0
  %118 = vmatpush1.msra.mxu0 0.0
  %119 = vmatprep.subr.mxu0 0.0
  %120 = vmatpush1.msra.mxu0 0.0
  %121 = vmatprep.subr.mxu0 0.0
  %122 = vmatpush1.msra.mxu0 0.0
  %123 = vmatprep.subr.mxu0 0.0
  %124 = vmatpush1.msra.mxu0 0.0
  %125 = vmatprep.subr.mxu0 0.0
  %126 = vmatpush1.msra.mxu0 0.0
  %127 = vmatprep.subr.mxu0 0.0
  %128 = vmatpush1.msra.mxu0 %v88
  %129 = vmatprep.subr.mxu0 0.0
  %130 = vmatpush1.msra.mxu0 %v87
  %131 = vmatprep.subr.mxu0 0.0
  %132 = vmatpush1.msra.mxu0 %v86
  %133 = vmatprep.subr.mxu0 0.0
  %134 = vmatpush1.msra.mxu0 %v85
  %135 = vmatprep.subr.mxu0 0.0
  %136 = vmatpush2.msra.mxu0 0.0
  %137 = vmatprep.subr.mxu0 0.0
  %138 = vmatpush2.msra.mxu0 0.0
  %139 = vmatprep.subr.mxu0 0.0
  %140 = vmatpush2.msra.mxu0 0.0
  %141 = vmatprep.subr.mxu0 0.0
  %142 = vmatpush2.msra.mxu0 0.0
  %143 = vmatprep.subr.mxu0 0.0
  %144 = vmatpush2.msra.mxu0 0.0
  %145 = vmatprep.subr.mxu0 0.0
  %146 = vmatpush2.msra.mxu0 0.0
  %147 = vmatprep.subr.mxu0 0.0
  %148 = vmatpush2.msra.mxu0 0.0
  %149 = vmatprep.subr.mxu0 0.0
  %150 = vmatpush2.msra.mxu0 0.0
  %151 = vmatprep.subr.mxu0 0.0
  %152 = vmatpush2.msra.mxu0 0.0
  %153 = vmatprep.subr.mxu0 0.0
  %154 = vmatpush2.msra.mxu0 0.0
  %155 = vmatprep.subr.mxu0 0.0
  %156 = vmatpush2.msra.mxu0 0.0
  %157 = vmatprep.subr.mxu0 0.0
  %158 = vmatpush2.msra.mxu0 0.0
  %159 = vmatprep.subr.mxu0 0.0
  %160 = vmatpush2.msra.mxu0 0.0
  %161 = vmatprep.subr.mxu0 0.0
  %162 = vmatpush2.msra.mxu0 0.0
  %163 = vmatprep.subr.mxu0 0.0
  %164 = vmatpush2.msra.mxu0 0.0
  %165 = vmatprep.subr.mxu0 0.0
  %166 = vmatpush2.msra.mxu0 0.0
  %167 = vmatprep.mubr.f32.mxu0 0.0
  %168 = vmatmul.mubr.f32.gmra.mxu0 %v98
  %v169 = vpop.f32.mrf.mxu0
  %v170 = vadd.f32 %v94, %v169
  %v171 = vpop.f32.mrf.mxu0
  %172 = vmatprep.mubr.f32.mxu0 0.0
  %173 = vmatmul.mubr.f32.gmra.mxu0 %v101
  %v174 = vpop.f32.mrf.mxu0
  %v175 = vadd.f32 %v94, %v174
  %v176 = vpop.f32.mrf.mxu0
  %177 = vdwg.mxu0
  %v178 = vld [vmem:[%s2] sm:$0xff]
  %v179 = vld [vmem:[%s2 + $0x8] sm:$0xff]
  %v180 = vld [vmem:[%s2 + $0x10] sm:$0xff]
  %v181 = vld [vmem:[%s2 + $0x18] sm:$0xff]
  %v182 = vld [vmem:[%s4] sm:$0x1]
  %v184 = vlaneseq
  %v185 = vshrl.u32 %v184, 7
  %v186 = vsub.s32 0, %v185
  %v187 = vrot.slane %v182, %v186
  %v190 = vsel %vm96, 0.0, 0
  %192 = vmatprep.subr.mxu0 0.0
  %193 = vmatpush1.msra.mxu0 0.0
  %194 = vmatprep.subr.mxu0 0.0
  %195 = vmatpush1.msra.mxu0 0.0
  %196 = vmatprep.subr.mxu0 0.0
  %197 = vmatpush1.msra.mxu0 0.0
  %198 = vmatprep.subr.mxu0 0.0
  %199 = vmatpush1.msra.mxu0 0.0
  %200 = vmatprep.subr.mxu0 0.0
  %201 = vmatpush1.msra.mxu0 0.0
  %202 = vmatprep.subr.mxu0 0.0
  %203 = vmatpush1.msra.mxu0 0.0
  %204 = vmatprep.subr.mxu0 0.0
  %205 = vmatpush1.msra.mxu0 0.0
  %206 = vmatprep.subr.mxu0 0.0
  %207 = vmatpush1.msra.mxu0 0.0
  %208 = vmatprep.subr.mxu0 0.0
  %209 = vmatpush1.msra.mxu0 0.0
  %210 = vmatprep.subr.mxu0 0.0
  %211 = vmatpush1.msra.mxu0 0.0
  %212 = vmatprep.subr.mxu0 0.0
  %213 = vmatpush1.msra.mxu0 0.0
  %214 = vmatprep.subr.mxu0 0.0
  %215 = vmatpush1.msra.mxu0 0.0
  %216 = vmatprep.subr.mxu0 0.0
  %217 = vmatpush1.msra.mxu0 %v181
  %218 = vmatprep.subr.mxu0 0.0
  %219 = vmatpush1.msra.mxu0 %v180
  %220 = vmatprep.subr.mxu0 0.0
  %221 = vmatpush1.msra.mxu0 %v179
  %222 = vmatprep.subr.mxu0 0.0
  %223 = vmatpush1.msra.mxu0 %v178
  %224 = vmatprep.subr.mxu0 0.0
  %225 = vmatpush2.msra.mxu0 0.0
  %226 = vmatprep.subr.mxu0 0.0
  %227 = vmatpush2.msra.mxu0 0.0
  %228 = vmatprep.subr.mxu0 0.0
  %229 = vmatpush2.msra.mxu0 0.0
  %230 = vmatprep.subr.mxu0 0.0
  %231 = vmatpush2.msra.mxu0 0.0
  %232 = vmatprep.subr.mxu0 0.0
  %233 = vmatpush2.msra.mxu0 0.0
  %234 = vmatprep.subr.mxu0 0.0
  %235 = vmatpush2.msra.mxu0 0.0
  %236 = vmatprep.subr.mxu0 0.0
  %237 = vmatpush2.msra.mxu0 0.0
  %238 = vmatprep.subr.mxu0 0.0
  %239 = vmatpush2.msra.mxu0 0.0
  %240 = vmatprep.subr.mxu0 0.0
  %241 = vmatpush2.msra.mxu0 0.0
  %242 = vmatprep.subr.mxu0 0.0
  %243 = vmatpush2.msra.mxu0 0.0
  %244 = vmatprep.subr.mxu0 0.0
  %245 = vmatpush2.msra.mxu0 0.0
  %246 = vmatprep.subr.mxu0 0.0
  %247 = vmatpush2.msra.mxu0 0.0
  %248 = vmatprep.subr.mxu0 0.0
  %249 = vmatpush2.msra.mxu0 0.0
  %250 = vmatprep.subr.mxu0 0.0
  %251 = vmatpush2.msra.mxu0 0.0
  %252 = vmatprep.subr.mxu0 0.0
  %253 = vmatpush2.msra.mxu0 0.0
  %254 = vmatprep.subr.mxu0 0.0
  %255 = vmatpush2.msra.mxu0 0.0
  %256 = vmatprep.mubr.f32.mxu0 0.0
  %257 = vmatmul.mubr.f32.gmra.mxu0 %v190
  %v258 = vpop.f32.mrf.mxu0
  %v259 = vadd.f32 %v187, %v258
  %v260 = vpop.f32.mrf.mxu0
  %261 = vdwg.mxu0
  %v262 = vadd.f32 %v170, %v259
  %v263 = vxor.u32 %v262, 2147483648
  %v264 = vmul.f32 %v263, 1.442695
  %v265 = vpow.pop %v264
  %v266 = vadd.f32 %v265, 1.0
  %v267 = vrcp.pop %v266
  %v268 = vmul.f32 1.0, %v267
  %270 = vrot.lane.b32.xlu0 %v259, 64
  %v271 = vpop.permute.xlu0 %270
  %v273 = vmul.f32 %v268, %v271
  %275 = vrot.lane.b32.xlu0 %v273, 64
  %v276 = vpop.permute.xlu0 %275
  %v278 = vadd.f32 %v170, %v276
  %v279 = vtanh.pop %v278
  %v280 = vsub.f32 1.0, %v268
  %282 = vrot.lane.b32.xlu0 %v279, 96
  %v283 = vpop.permute.xlu0 %282
  %v285 = vmul.f32 %v280, %v283
  %v286 = vmul.f32 %v268, 0.0
  %v287 = vadd.f32 %v285, %v286
  %289 = vrot.lane.b32.xlu0 %v287, 96
  %v290 = vpop.permute.xlu0 %289
  %v291 = vsel %vm96, %v290, 0
  %293 = vmatprep.subr.mxu0 0.0
  %294 = vmatpush1.msra.mxu0 0.0
  %295 = vmatprep.subr.mxu0 0.0
  %296 = vmatpush1.msra.mxu0 0.0
  %297 = vmatprep.subr.mxu0 0.0
  %298 = vmatpush1.msra.mxu0 0.0
  %299 = vmatprep.subr.mxu0 0.0
  %300 = vmatpush1.msra.mxu0 0.0
  %301 = vmatprep.subr.mxu0 0.0
  %302 = vmatpush1.msra.mxu0 0.0
  %303 = vmatprep.subr.mxu0 0.0
  %304 = vmatpush1.msra.mxu0 0.0
  %305 = vmatprep.subr.mxu0 0.0
  %306 = vmatpush1.msra.mxu0 0.0
  %307 = vmatprep.subr.mxu0 0.0
  %308 = vmatpush1.msra.mxu0 0.0
  %309 = vmatprep.subr.mxu0 0.0
  %310 = vmatpush1.msra.mxu0 0.0
  %311 = vmatprep.subr.mxu0 0.0
  %312 = vmatpush1.msra.mxu0 0.0
  %313 = vmatprep.subr.mxu0 0.0
  %314 = vmatpush1.msra.mxu0 0.0
  %315 = vmatprep.subr.mxu0 0.0
  %316 = vmatpush1.msra.mxu0 0.0
  %317 = vmatprep.subr.mxu0 0.0
  %318 = vmatpush1.msra.mxu0 %v181
  %319 = vmatprep.subr.mxu0 0.0
  %320 = vmatpush1.msra.mxu0 %v180
  %321 = vmatprep.subr.mxu0 0.0
  %322 = vmatpush1.msra.mxu0 %v179
  %323 = vmatprep.subr.mxu0 0.0
  %324 = vmatpush1.msra.mxu0 %v178
  %325 = vmatprep.subr.mxu0 0.0
  %326 = vmatpush2.msra.mxu0 0.0
  %327 = vmatprep.subr.mxu0 0.0
  %328 = vmatpush2.msra.mxu0 0.0
  %329 = vmatprep.subr.mxu0 0.0
  %330 = vmatpush2.msra.mxu0 0.0
  %331 = vmatprep.subr.mxu0 0.0
  %332 = vmatpush2.msra.mxu0 0.0
  %333 = vmatprep.subr.mxu0 0.0
  %334 = vmatpush2.msra.mxu0 0.0
  %335 = vmatprep.subr.mxu0 0.0
  %336 = vmatpush2.msra.mxu0 0.0
  %337 = vmatprep.subr.mxu0 0.0
  %338 = vmatpush2.msra.mxu0 0.0
  %339 = vmatprep.subr.mxu0 0.0
  %340 = vmatpush2.msra.mxu0 0.0
  %341 = vmatprep.subr.mxu0 0.0
  %342 = vmatpush2.msra.mxu0 0.0
  %343 = vmatprep.subr.mxu0 0.0
  %344 = vmatpush2.msra.mxu0 0.0
  %345 = vmatprep.subr.mxu0 0.0
  %346 = vmatpush2.msra.mxu0 0.0
  %347 = vmatprep.subr.mxu0 0.0
  %348 = vmatpush2.msra.mxu0 0.0
  %349 = vmatprep.subr.mxu0 0.0
  %350 = vmatpush2.msra.mxu0 0.0
  %351 = vmatprep.subr.mxu0 0.0
  %352 = vmatpush2.msra.mxu0 0.0
  %353 = vmatprep.subr.mxu0 0.0
  %354 = vmatpush2.msra.mxu0 0.0
  %355 = vmatprep.subr.mxu0 0.0
  %356 = vmatpush2.msra.mxu0 0.0
  %357 = vmatprep.mubr.f32.mxu0 0.0
  %358 = vmatmul.mubr.f32.gmra.mxu0 %v291
  %v359 = vpop.f32.mrf.mxu0
  %v360 = vadd.f32 %v187, %v359
  %v361 = vpop.f32.mrf.mxu0
  %362 = vdwg.mxu0
  %v364 = vrot.slane %v360, 6
  %v366 = vadd.f32 %v170, %v364
  %v367 = vxor.u32 %v366, 2147483648
  %v368 = vmul.f32 %v367, 1.442695
  %v369 = vpow.pop %v368
  %v370 = vadd.f32 %v369, 1.0
  %v371 = vrcp.pop %v370
  %v372 = vmul.f32 1.0, %v371
  %373 = vrot.lane.b32.xlu0 %v364, 64
  %v374 = vpop.permute.xlu0 %373
  %v376 = vmul.f32 %v372, %v374
  %378 = vrot.lane.b32.xlu0 %v376, 64
  %v379 = vpop.permute.xlu0 %378
  %v381 = vadd.f32 %v170, %v379
  %v382 = vtanh.pop %v381
  %v383 = vsub.f32 1.0, %v372
  %385 = vrot.lane.b32.xlu0 %v382, 96
  %v386 = vpop.permute.xlu0 %385
  %v388 = vmul.f32 %v383, %v386
  %v389 = vrot.slane %v287, 6
  %v391 = vmul.f32 %v372, %v389
  %v392 = vadd.f32 %v388, %v391
  %v394 = vrot.slane %v392, 2
  %395 = vrot.lane.b32.xlu0 %v394, 96
  %v396 = vpop.permute.xlu0 %395
  %v397 = vsel %vm96, %v396, 0
  %399 = vmatprep.subr.mxu0 0.0
  %400 = vmatpush1.msra.mxu0 0.0
  %401 = vmatprep.subr.mxu0 0.0
  %402 = vmatpush1.msra.mxu0 0.0
  %403 = vmatprep.subr.mxu0 0.0
  %404 = vmatpush1.msra.mxu0 0.0
  %405 = vmatprep.subr.mxu0 0.0
  %406 = vmatpush1.msra.mxu0 0.0
  %407 = vmatprep.subr.mxu0 0.0
  %408 = vmatpush1.msra.mxu0 0.0
  %409 = vmatprep.subr.mxu0 0.0
  %410 = vmatpush1.msra.mxu0 0.0
  %411 = vmatprep.subr.mxu0 0.0
  %412 = vmatpush1.msra.mxu0 0.0
  %413 = vmatprep.subr.mxu0 0.0
  %414 = vmatpush1.msra.mxu0 0.0
  %415 = vmatprep.subr.mxu0 0.0
  %416 = vmatpush1.msra.mxu0 0.0
  %417 = vmatprep.subr.mxu0 0.0
  %418 = vmatpush1.msra.mxu0 0.0
  %419 = vmatprep.subr.mxu0 0.0
  %420 = vmatpush1.msra.mxu0 0.0
  %421 = vmatprep.subr.mxu0 0.0
  %422 = vmatpush1.msra.mxu0 0.0
  %423 = vmatprep.subr.mxu0 0.0
  %424 = vmatpush1.msra.mxu0 %v181
  %425 = vmatprep.subr.mxu0 0.0
  %426 = vmatpush1.msra.mxu0 %v180
  %427 = vmatprep.subr.mxu0 0.0
  %428 = vmatpush1.msra.mxu0 %v179
  %429 = vmatprep.subr.mxu0 0.0
  %430 = vmatpush1.msra.mxu0 %v178
  %431 = vmatprep.subr.mxu0 0.0
  %432 = vmatpush2.msra.mxu0 0.0
  %433 = vmatprep.subr.mxu0 0.0
  %434 = vmatpush2.msra.mxu0 0.0
  %435 = vmatprep.subr.mxu0 0.0
  %436 = vmatpush2.msra.mxu0 0.0
  %437 = vmatprep.subr.mxu0 0.0
  %438 = vmatpush2.msra.mxu0 0.0
  %439 = vmatprep.subr.mxu0 0.0
  %440 = vmatpush2.msra.mxu0 0.0
  %441 = vmatprep.subr.mxu0 0.0
  %442 = vmatpush2.msra.mxu0 0.0
  %443 = vmatprep.subr.mxu0 0.0
  %444 = vmatpush2.msra.mxu0 0.0
  %445 = vmatprep.subr.mxu0 0.0
  %446 = vmatpush2.msra.mxu0 0.0
  %447 = vmatprep.subr.mxu0 0.0
  %448 = vmatpush2.msra.mxu0 0.0
  %449 = vmatprep.subr.mxu0 0.0
  %450 = vmatpush2.msra.mxu0 0.0
  %451 = vmatprep.subr.mxu0 0.0
  %452 = vmatpush2.msra.mxu0 0.0
  %453 = vmatprep.subr.mxu0 0.0
  %454 = vmatpush2.msra.mxu0 0.0
  %455 = vmatprep.subr.mxu0 0.0
  %456 = vmatpush2.msra.mxu0 0.0
  %457 = vmatprep.subr.mxu0 0.0
  %458 = vmatpush2.msra.mxu0 0.0
  %459 = vmatprep.subr.mxu0 0.0
  %460 = vmatpush2.msra.mxu0 0.0
  %461 = vmatprep.subr.mxu0 0.0
  %462 = vmatpush2.msra.mxu0 0.0
  %463 = vmatprep.mubr.f32.mxu0 0.0
  %464 = vmatmul.mubr.f32.gmra.mxu0 %v397
  %v465 = vpop.f32.mrf.mxu0
  %v466 = vadd.f32 %v187, %v465
  %v467 = vpop.f32.mrf.mxu0
  %468 = vdwg.mxu0
  %v470 = vrot.slane %v466, 4
  %v472 = vadd.f32 %v170, %v470
  %v473 = vxor.u32 %v472, 2147483648
  %v474 = vmul.f32 %v473, 1.442695
  %v475 = vpow.pop %v474
  %v476 = vadd.f32 %v475, 1.0
  %v477 = vrcp.pop %v476
  %v478 = vmul.f32 1.0, %v477
  %479 = vrot.lane.b32.xlu0 %v470, 64
  %v480 = vpop.permute.xlu0 %479
  %v482 = vmul.f32 %v478, %v480
  %484 = vrot.lane.b32.xlu0 %v482, 64
  %v485 = vpop.permute.xlu0 %484
  %v487 = vadd.f32 %v170, %v485
  %v488 = vtanh.pop %v487
  %v489 = vsub.f32 1.0, %v478
  %491 = vrot.lane.b32.xlu0 %v488, 96
  %v492 = vpop.permute.xlu0 %491
  %v494 = vmul.f32 %v489, %v492
  %v495 = vrot.slane %v392, 6
  %v497 = vmul.f32 %v478, %v495
  %v498 = vadd.f32 %v494, %v497
  %v500 = vrot.slane %v498, 4
  %501 = vrot.lane.b32.xlu0 %v500, 96
  %v502 = vpop.permute.xlu0 %501
  %v503 = vsel %vm96, %v502, 0
  %505 = vmatprep.subr.mxu0 0.0
  %506 = vmatpush1.msra.mxu0 0.0
  %507 = vmatprep.subr.mxu0 0.0
  %508 = vmatpush1.msra.mxu0 0.0
  %509 = vmatprep.subr.mxu0 0.0
  %510 = vmatpush1.msra.mxu0 0.0
  %511 = vmatprep.subr.mxu0 0.0
  %512 = vmatpush1.msra.mxu0 0.0
  %513 = vmatprep.subr.mxu0 0.0
  %514 = vmatpush1.msra.mxu0 0.0
  %515 = vmatprep.subr.mxu0 0.0
  %516 = vmatpush1.msra.mxu0 0.0
  %517 = vmatprep.subr.mxu0 0.0
  %518 = vmatpush1.msra.mxu0 0.0
  %519 = vmatprep.subr.mxu0 0.0
  %520 = vmatpush1.msra.mxu0 0.0
  %521 = vmatprep.subr.mxu0 0.0
  %522 = vmatpush1.msra.mxu0 0.0
  %523 = vmatprep.subr.mxu0 0.0
  %524 = vmatpush1.msra.mxu0 0.0
  %525 = vmatprep.subr.mxu0 0.0
  %526 = vmatpush1.msra.mxu0 0.0
  %527 = vmatprep.subr.mxu0 0.0
  %528 = vmatpush1.msra.mxu0 0.0
  %529 = vmatprep.subr.mxu0 0.0
  %530 = vmatpush1.msra.mxu0 %v181
  %531 = vmatprep.subr.mxu0 0.0
  %532 = vmatpush1.msra.mxu0 %v180
  %533 = vmatprep.subr.mxu0 0.0
  %534 = vmatpush1.msra.mxu0 %v179
  %535 = vmatprep.subr.mxu0 0.0
  %536 = vmatpush1.msra.mxu0 %v178
  %537 = vmatprep.subr.mxu0 0.0
  %538 = vmatpush2.msra.mxu0 0.0
  %539 = vmatprep.subr.mxu0 0.0
  %540 = vmatpush2.msra.mxu0 0.0
  %541 = vmatprep.subr.mxu0 0.0
  %542 = vmatpush2.msra.mxu0 0.0
  %543 = vmatprep.subr.mxu0 0.0
  %544 = vmatpush2.msra.mxu0 0.0
  %545 = vmatprep.subr.mxu0 0.0
  %546 = vmatpush2.msra.mxu0 0.0
  %547 = vmatprep.subr.mxu0 0.0
  %548 = vmatpush2.msra.mxu0 0.0
  %549 = vmatprep.subr.mxu0 0.0
  %550 = vmatpush2.msra.mxu0 0.0
  %551 = vmatprep.subr.mxu0 0.0
  %552 = vmatpush2.msra.mxu0 0.0
  %553 = vmatprep.subr.mxu0 0.0
  %554 = vmatpush2.msra.mxu0 0.0
  %555 = vmatprep.subr.mxu0 0.0
  %556 = vmatpush2.msra.mxu0 0.0
  %557 = vmatprep.subr.mxu0 0.0
  %558 = vmatpush2.msra.mxu0 0.0
  %559 = vmatprep.subr.mxu0 0.0
  %560 = vmatpush2.msra.mxu0 0.0
  %561 = vmatprep.subr.mxu0 0.0
  %562 = vmatpush2.msra.mxu0 0.0
  %563 = vmatprep.subr.mxu0 0.0
  %564 = vmatpush2.msra.mxu0 0.0
  %565 = vmatprep.subr.mxu0 0.0
  %566 = vmatpush2.msra.mxu0 0.0
  %567 = vmatprep.subr.mxu0 0.0
  %568 = vmatpush2.msra.mxu0 0.0
  %569 = vmatprep.mubr.f32.mxu0 0.0
  %570 = vmatmul.mubr.f32.gmra.mxu0 %v503
  %v571 = vpop.f32.mrf.mxu0
  %v572 = vadd.f32 %v187, %v571
  %v573 = vpop.f32.mrf.mxu0
  %574 = vdwg.mxu0
  %v576 = vrot.slane %v572, 2
  %v578 = vadd.f32 %v170, %v576
  %v579 = vxor.u32 %v578, 2147483648
  %v580 = vmul.f32 %v579, 1.442695
  %v581 = vpow.pop %v580
  %v582 = vadd.f32 %v581, 1.0
  %v583 = vrcp.pop %v582
  %v584 = vmul.f32 1.0, %v583
  %585 = vrot.lane.b32.xlu0 %v576, 64
  %v586 = vpop.permute.xlu0 %585
  %v588 = vmul.f32 %v584, %v586
  %590 = vrot.lane.b32.xlu0 %v588, 64
  %v591 = vpop.permute.xlu0 %590
  %v593 = vadd.f32 %v170, %v591
  %v594 = vtanh.pop %v593
  %v595 = vsub.f32 1.0, %v584
  %597 = vrot.lane.b32.xlu0 %v594, 96
  %v598 = vpop.permute.xlu0 %597
  %v600 = vmul.f32 %v595, %v598
  %v601 = vrot.slane %v498, 6
  %v603 = vmul.f32 %v584, %v601
  %v604 = vadd.f32 %v600, %v603
  %v606 = vrot.slane %v604, 6
  %607 = vrot.lane.b32.xlu0 %v606, 96
  %v608 = vpop.permute.xlu0 %607
  %v609 = vsel %vm96, %v608, 0
  %611 = vmatprep.subr.mxu0 0.0
  %612 = vmatpush1.msra.mxu0 0.0
  %613 = vmatprep.subr.mxu0 0.0
  %614 = vmatpush1.msra.mxu0 0.0
  %615 = vmatprep.subr.mxu0 0.0
  %616 = vmatpush1.msra.mxu0 0.0
  %617 = vmatprep.subr.mxu0 0.0
  %618 = vmatpush1.msra.mxu0 0.0
  %619 = vmatprep.subr.mxu0 0.0
  %620 = vmatpush1.msra.mxu0 0.0
  %621 = vmatprep.subr.mxu0 0.0
  %622 = vmatpush1.msra.mxu0 0.0
  %623 = vmatprep.subr.mxu0 0.0
  %624 = vmatpush1.msra.mxu0 0.0
  %625 = vmatprep.subr.mxu0 0.0
  %626 = vmatpush1.msra.mxu0 0.0
  %627 = vmatprep.subr.mxu0 0.0
  %628 = vmatpush1.msra.mxu0 0.0
  %629 = vmatprep.subr.mxu0 0.0
  %630 = vmatpush1.msra.mxu0 0.0
  %631 = vmatprep.subr.mxu0 0.0
  %632 = vmatpush1.msra.mxu0 0.0
  %633 = vmatprep.subr.mxu0 0.0
  %634 = vmatpush1.msra.mxu0 0.0
  %635 = vmatprep.subr.mxu0 0.0
  %636 = vmatpush1.msra.mxu0 %v181
  %637 = vmatprep.subr.mxu0 0.0
  %638 = vmatpush1.msra.mxu0 %v180
  %639 = vmatprep.subr.mxu0 0.0
  %640 = vmatpush1.msra.mxu0 %v179
  %641 = vmatprep.subr.mxu0 0.0
  %642 = vmatpush1.msra.mxu0 %v178
  %643 = vmatprep.subr.mxu0 0.0
  %644 = vmatpush2.msra.mxu0 0.0
  %645 = vmatprep.subr.mxu0 0.0
  %646 = vmatpush2.msra.mxu0 0.0
  %647 = vmatprep.subr.mxu0 0.0
  %648 = vmatpush2.msra.mxu0 0.0
  %649 = vmatprep.subr.mxu0 0.0
  %650 = vmatpush2.msra.mxu0 0.0
  %651 = vmatprep.subr.mxu0 0.0
  %652 = vmatpush2.msra.mxu0 0.0
  %653 = vmatprep.subr.mxu0 0.0
  %654 = vmatpush2.msra.mxu0 0.0
  %655 = vmatprep.subr.mxu0 0.0
  %656 = vmatpush2.msra.mxu0 0.0
  %657 = vmatprep.subr.mxu0 0.0
  %658 = vmatpush2.msra.mxu0 0.0
  %659 = vmatprep.subr.mxu0 0.0
  %660 = vmatpush2.msra.mxu0 0.0
  %661 = vmatprep.subr.mxu0 0.0
  %662 = vmatpush2.msra.mxu0 0.0
  %663 = vmatprep.subr.mxu0 0.0
  %664 = vmatpush2.msra.mxu0 0.0
  %665 = vmatprep.subr.mxu0 0.0
  %666 = vmatpush2.msra.mxu0 0.0
  %667 = vmatprep.subr.mxu0 0.0
  %668 = vmatpush2.msra.mxu0 0.0
  %669 = vmatprep.subr.mxu0 0.0
  %670 = vmatpush2.msra.mxu0 0.0
  %671 = vmatprep.subr.mxu0 0.0
  %672 = vmatpush2.msra.mxu0 0.0
  %673 = vmatprep.subr.mxu0 0.0
  %674 = vmatpush2.msra.mxu0 0.0
  %675 = vmatprep.mubr.f32.mxu0 0.0
  %676 = vmatmul.mubr.f32.gmra.mxu0 %v609
  %v677 = vpop.f32.mrf.mxu0
  %v678 = vadd.f32 %v187, %v677
  %v679 = vpop.f32.mrf.mxu0
  %680 = vdwg.mxu0
  %v681 = vadd.f32 %v175, %v678
  %v682 = vxor.u32 %v681, 2147483648
  %v683 = vmul.f32 %v682, 1.442695
  %v684 = vpow.pop %v683
  %v685 = vadd.f32 %v684, 1.0
  %v686 = vrcp.pop %v685
  %v687 = vmul.f32 1.0, %v686
  %689 = vrot.lane.b32.xlu0 %v678, 64
  %v690 = vpop.permute.xlu0 %689
  %v692 = vmul.f32 %v687, %v690
  %694 = vrot.lane.b32.xlu0 %v692, 64
  %v695 = vpop.permute.xlu0 %694
  %v697 = vadd.f32 %v175, %v695
  %v698 = vtanh.pop %v697
  %v699 = vsub.f32 1.0, %v687
  %701 = vrot.lane.b32.xlu0 %v698, 96
  %v702 = vpop.permute.xlu0 %701
  %v704 = vmul.f32 %v699, %v702
  %v706 = vmul.f32 %v687, %v606
  %v707 = vadd.f32 %v704, %v706
  %709 = vrot.lane.b32.xlu0 %v707, 96
  %v710 = vpop.permute.xlu0 %709
  %v711 = vsel %vm96, %v710, 0
  %713 = vmatprep.subr.mxu0 0.0
  %714 = vmatpush1.msra.mxu0 0.0
  %715 = vmatprep.subr.mxu0 0.0
  %716 = vmatpush1.msra.mxu0 0.0
  %717 = vmatprep.subr.mxu0 0.0
  %718 = vmatpush1.msra.mxu0 0.0
  %719 = vmatprep.subr.mxu0 0.0
  %720 = vmatpush1.msra.mxu0 0.0
  %721 = vmatprep.subr.mxu0 0.0
  %722 = vmatpush1.msra.mxu0 0.0
  %723 = vmatprep.subr.mxu0 0.0
  %724 = vmatpush1.msra.mxu0 0.0
  %725 = vmatprep.subr.mxu0 0.0
  %726 = vmatpush1.msra.mxu0 0.0
  %727 = vmatprep.subr.mxu0 0.0
  %728 = vmatpush1.msra.mxu0 0.0
  %729 = vmatprep.subr.mxu0 0.0
  %730 = vmatpush1.msra.mxu0 0.0
  %731 = vmatprep.subr.mxu0 0.0
  %732 = vmatpush1.msra.mxu0 0.0
  %733 = vmatprep.subr.mxu0 0.0
  %734 = vmatpush1.msra.mxu0 0.0
  %735 = vmatprep.subr.mxu0 0.0
  %736 = vmatpush1.msra.mxu0 0.0
  %737 = vmatprep.subr.mxu0 0.0
  %738 = vmatpush1.msra.mxu0 %v181
  %739 = vmatprep.subr.mxu0 0.0
  %740 = vmatpush1.msra.mxu0 %v180
  %741 = vmatprep.subr.mxu0 0.0
  %742 = vmatpush1.msra.mxu0 %v179
  %743 = vmatprep.subr.mxu0 0.0
  %744 = vmatpush1.msra.mxu0 %v178
  %745 = vmatprep.subr.mxu0 0.0
  %746 = vmatpush2.msra.mxu0 0.0
  %747 = vmatprep.subr.mxu0 0.0
  %748 = vmatpush2.msra.mxu0 0.0
  %749 = vmatprep.subr.mxu0 0.0
  %750 = vmatpush2.msra.mxu0 0.0
  %751 = vmatprep.subr.mxu0 0.0
  %752 = vmatpush2.msra.mxu0 0.0
  %753 = vmatprep.subr.mxu0 0.0
  %754 = vmatpush2.msra.mxu0 0.0
  %755 = vmatprep.subr.mxu0 0.0
  %756 = vmatpush2.msra.mxu0 0.0
  %757 = vmatprep.subr.mxu0 0.0
  %758 = vmatpush2.msra.mxu0 0.0
  %759 = vmatprep.subr.mxu0 0.0
  %760 = vmatpush2.msra.mxu0 0.0
  %761 = vmatprep.subr.mxu0 0.0
  %762 = vmatpush2.msra.mxu0 0.0
  %763 = vmatprep.subr.mxu0 0.0
  %764 = vmatpush2.msra.mxu0 0.0
  %765 = vmatprep.subr.mxu0 0.0
  %766 = vmatpush2.msra.mxu0 0.0
  %767 = vmatprep.subr.mxu0 0.0
  %768 = vmatpush2.msra.mxu0 0.0
  %769 = vmatprep.subr.mxu0 0.0
  %770 = vmatpush2.msra.mxu0 0.0
  %771 = vmatprep.subr.mxu0 0.0
  %772 = vmatpush2.msra.mxu0 0.0
  %773 = vmatprep.subr.mxu0 0.0
  %774 = vmatpush2.msra.mxu0 0.0
  %775 = vmatprep.subr.mxu0 0.0
  %776 = vmatpush2.msra.mxu0 0.0
  %777 = vmatprep.mubr.f32.mxu0 0.0
  %778 = vmatmul.mubr.f32.gmra.mxu0 %v711
  %v779 = vpop.f32.mrf.mxu0
  %v780 = vadd.f32 %v187, %v779
  %v781 = vpop.f32.mrf.mxu0
  %782 = vdwg.mxu0
  %v784 = vrot.slane %v780, 6
  %v786 = vadd.f32 %v175, %v784
  %v787 = vxor.u32 %v786, 2147483648
  %v788 = vmul.f32 %v787, 1.442695
  %v789 = vpow.pop %v788
  %v790 = vadd.f32 %v789, 1.0
  %v791 = vrcp.pop %v790
  %v792 = vmul.f32 1.0, %v791
  %793 = vrot.lane.b32.xlu0 %v784, 64
  %v794 = vpop.permute.xlu0 %793
  %v796 = vmul.f32 %v792, %v794
  %798 = vrot.lane.b32.xlu0 %v796, 64
  %v799 = vpop.permute.xlu0 %798
  %v801 = vadd.f32 %v175, %v799
  %v802 = vtanh.pop %v801
  %v803 = vsub.f32 1.0, %v792
  %805 = vrot.lane.b32.xlu0 %v802, 96
  %v806 = vpop.permute.xlu0 %805
  %v808 = vmul.f32 %v803, %v806
  %v809 = vrot.slane %v707, 6
  %v811 = vmul.f32 %v792, %v809
  %v812 = vadd.f32 %v808, %v811
  %v814 = vrot.slane %v812, 2
  %815 = vrot.lane.b32.xlu0 %v814, 96
  %v816 = vpop.permute.xlu0 %815
  %v817 = vsel %vm96, %v816, 0
  %819 = vmatprep.subr.mxu0 0.0
  %820 = vmatpush1.msra.mxu0 0.0
  %821 = vmatprep.subr.mxu0 0.0
  %822 = vmatpush1.msra.mxu0 0.0
  %823 = vmatprep.subr.mxu0 0.0
  %824 = vmatpush1.msra.mxu0 0.0
  %825 = vmatprep.subr.mxu0 0.0
  %826 = vmatpush1.msra.mxu0 0.0
  %827 = vmatprep.subr.mxu0 0.0
  %828 = vmatpush1.msra.mxu0 0.0
  %829 = vmatprep.subr.mxu0 0.0
  %830 = vmatpush1.msra.mxu0 0.0
  %831 = vmatprep.subr.mxu0 0.0
  %832 = vmatpush1.msra.mxu0 0.0
  %833 = vmatprep.subr.mxu0 0.0
  %834 = vmatpush1.msra.mxu0 0.0
  %835 = vmatprep.subr.mxu0 0.0
  %836 = vmatpush1.msra.mxu0 0.0
  %837 = vmatprep.subr.mxu0 0.0
  %838 = vmatpush1.msra.mxu0 0.0
  %839 = vmatprep.subr.mxu0 0.0
  %840 = vmatpush1.msra.mxu0 0.0
  %841 = vmatprep.subr.mxu0 0.0
  %842 = vmatpush1.msra.mxu0 0.0
  %843 = vmatprep.subr.mxu0 0.0
  %844 = vmatpush1.msra.mxu0 %v181
  %845 = vmatprep.subr.mxu0 0.0
  %846 = vmatpush1.msra.mxu0 %v180
  %847 = vmatprep.subr.mxu0 0.0
  %848 = vmatpush1.msra.mxu0 %v179
  %849 = vmatprep.subr.mxu0 0.0
  %850 = vmatpush1.msra.mxu0 %v178
  %851 = vmatprep.subr.mxu0 0.0
  %852 = vmatpush2.msra.mxu0 0.0
  %853 = vmatprep.subr.mxu0 0.0
  %854 = vmatpush2.msra.mxu0 0.0
  %855 = vmatprep.subr.mxu0 0.0
  %856 = vmatpush2.msra.mxu0 0.0
  %857 = vmatprep.subr.mxu0 0.0
  %858 = vmatpush2.msra.mxu0 0.0
  %859 = vmatprep.subr.mxu0 0.0
  %860 = vmatpush2.msra.mxu0 0.0
  %861 = vmatprep.subr.mxu0 0.0
  %862 = vmatpush2.msra.mxu0 0.0
  %863 = vmatprep.subr.mxu0 0.0
  %864 = vmatpush2.msra.mxu0 0.0
  %865 = vmatprep.subr.mxu0 0.0
  %866 = vmatpush2.msra.mxu0 0.0
  %867 = vmatprep.subr.mxu0 0.0
  %868 = vmatpush2.msra.mxu0 0.0
  %869 = vmatprep.subr.mxu0 0.0
  %870 = vmatpush2.msra.mxu0 0.0
  %871 = vmatprep.subr.mxu0 0.0
  %872 = vmatpush2.msra.mxu0 0.0
  %873 = vmatprep.subr.mxu0 0.0
  %874 = vmatpush2.msra.mxu0 0.0
  %875 = vmatprep.subr.mxu0 0.0
  %876 = vmatpush2.msra.mxu0 0.0
  %877 = vmatprep.subr.mxu0 0.0
  %878 = vmatpush2.msra.mxu0 0.0
  %879 = vmatprep.subr.mxu0 0.0
  %880 = vmatpush2.msra.mxu0 0.0
  %881 = vmatprep.subr.mxu0 0.0
  %882 = vmatpush2.msra.mxu0 0.0
  %883 = vmatprep.mubr.f32.mxu0 0.0
  %884 = vmatmul.mubr.f32.gmra.mxu0 %v817
  %v885 = vpop.f32.mrf.mxu0
  %v886 = vadd.f32 %v187, %v885
  %v887 = vpop.f32.mrf.mxu0
  %888 = vdwg.mxu0
  %v890 = vrot.slane %v886, 4
  %v892 = vadd.f32 %v175, %v890
  %v893 = vxor.u32 %v892, 2147483648
  %v894 = vmul.f32 %v893, 1.442695
  %v895 = vpow.pop %v894
  %v896 = vadd.f32 %v895, 1.0
  %v897 = vrcp.pop %v896
  %v898 = vmul.f32 1.0, %v897
  %899 = vrot.lane.b32.xlu0 %v890, 64
  %v900 = vpop.permute.xlu0 %899
  %v902 = vmul.f32 %v898, %v900
  %904 = vrot.lane.b32.xlu0 %v902, 64
  %v905 = vpop.permute.xlu0 %904
  %v907 = vadd.f32 %v175, %v905
  %v908 = vtanh.pop %v907
  %v909 = vsub.f32 1.0, %v898
  %911 = vrot.lane.b32.xlu0 %v908, 96
  %v912 = vpop.permute.xlu0 %911
  %v914 = vmul.f32 %v909, %v912
  %v915 = vrot.slane %v812, 6
  %v917 = vmul.f32 %v898, %v915
  %v918 = vadd.f32 %v914, %v917
  %v920 = vrot.slane %v918, 4
  %921 = vrot.lane.b32.xlu0 %v920, 96
  %v922 = vpop.permute.xlu0 %921
  %v923 = vsel %vm96, %v922, 0
  %925 = vmatprep.subr.mxu0 0.0
  %926 = vmatpush1.msra.mxu0 0.0
  %927 = vmatprep.subr.mxu0 0.0
  %928 = vmatpush1.msra.mxu0 0.0
  %929 = vmatprep.subr.mxu0 0.0
  %930 = vmatpush1.msra.mxu0 0.0
  %931 = vmatprep.subr.mxu0 0.0
  %932 = vmatpush1.msra.mxu0 0.0
  %933 = vmatprep.subr.mxu0 0.0
  %934 = vmatpush1.msra.mxu0 0.0
  %935 = vmatprep.subr.mxu0 0.0
  %936 = vmatpush1.msra.mxu0 0.0
  %937 = vmatprep.subr.mxu0 0.0
  %938 = vmatpush1.msra.mxu0 0.0
  %939 = vmatprep.subr.mxu0 0.0
  %940 = vmatpush1.msra.mxu0 0.0
  %941 = vmatprep.subr.mxu0 0.0
  %942 = vmatpush1.msra.mxu0 0.0
  %943 = vmatprep.subr.mxu0 0.0
  %944 = vmatpush1.msra.mxu0 0.0
  %945 = vmatprep.subr.mxu0 0.0
  %946 = vmatpush1.msra.mxu0 0.0
  %947 = vmatprep.subr.mxu0 0.0
  %948 = vmatpush1.msra.mxu0 0.0
  %949 = vmatprep.subr.mxu0 0.0
  %950 = vmatpush1.msra.mxu0 %v181
  %951 = vmatprep.subr.mxu0 0.0
  %952 = vmatpush1.msra.mxu0 %v180
  %953 = vmatprep.subr.mxu0 0.0
  %954 = vmatpush1.msra.mxu0 %v179
  %955 = vmatprep.subr.mxu0 0.0
  %956 = vmatpush1.msra.mxu0 %v178
  %957 = vmatprep.subr.mxu0 0.0
  %958 = vmatpush2.msra.mxu0 0.0
  %959 = vmatprep.subr.mxu0 0.0
  %960 = vmatpush2.msra.mxu0 0.0
  %961 = vmatprep.subr.mxu0 0.0
  %962 = vmatpush2.msra.mxu0 0.0
  %963 = vmatprep.subr.mxu0 0.0
  %964 = vmatpush2.msra.mxu0 0.0
  %965 = vmatprep.subr.mxu0 0.0
  %966 = vmatpush2.msra.mxu0 0.0
  %967 = vmatprep.subr.mxu0 0.0
  %968 = vmatpush2.msra.mxu0 0.0
  %969 = vmatprep.subr.mxu0 0.0
  %970 = vmatpush2.msra.mxu0 0.0
  %971 = vmatprep.subr.mxu0 0.0
  %972 = vmatpush2.msra.mxu0 0.0
  %973 = vmatprep.subr.mxu0 0.0
  %974 = vmatpush2.msra.mxu0 0.0
  %975 = vmatprep.subr.mxu0 0.0
  %976 = vmatpush2.msra.mxu0 0.0
  %977 = vmatprep.subr.mxu0 0.0
  %978 = vmatpush2.msra.mxu0 0.0
  %979 = vmatprep.subr.mxu0 0.0
  %980 = vmatpush2.msra.mxu0 0.0
  %981 = vmatprep.subr.mxu0 0.0
  %982 = vmatpush2.msra.mxu0 0.0
  %983 = vmatprep.subr.mxu0 0.0
  %984 = vmatpush2.msra.mxu0 0.0
  %985 = vmatprep.subr.mxu0 0.0
  %986 = vmatpush2.msra.mxu0 0.0
  %987 = vmatprep.subr.mxu0 0.0
  %988 = vmatpush2.msra.mxu0 0.0
  %989 = vmatprep.mubr.f32.mxu0 0.0
  %990 = vmatmul.mubr.f32.gmra.mxu0 %v923
  %v991 = vpop.f32.mrf.mxu0
  %v992 = vadd.f32 %v187, %v991
  %v993 = vpop.f32.mrf.mxu0
  %994 = vdwg.mxu0
  %v996 = vrot.slane %v992, 2
  %v998 = vadd.f32 %v175, %v996
  %v999 = vxor.u32 %v998, 2147483648
  %v1000 = vmul.f32 %v999, 1.442695
  %v1001 = vpow.pop %v1000
  %v1002 = vadd.f32 %v1001, 1.0
  %v1003 = vrcp.pop %v1002
  %v1004 = vmul.f32 1.0, %v1003
  %1005 = vrot.lane.b32.xlu0 %v996, 64
  %v1006 = vpop.permute.xlu0 %1005
  %v1008 = vmul.f32 %v1004, %v1006
  %1010 = vrot.lane.b32.xlu0 %v1008, 64
  %v1011 = vpop.permute.xlu0 %1010
  %v1013 = vadd.f32 %v175, %v1011
  %v1014 = vtanh.pop %v1013
  %v1015 = vsub.f32 1.0, %v1004
  %1017 = vrot.lane.b32.xlu0 %v1014, 96
  %v1018 = vpop.permute.xlu0 %1017
  %v1020 = vmul.f32 %v1015, %v1018
  %v1021 = vrot.slane %v918, 6
  %v1023 = vmul.f32 %v1004, %v1021
  %v1024 = vadd.f32 %v1020, %v1023
  %v1025 = vsel %vm66, %v287, %v392
  %v1026 = vsel %vm70, %v1025, %v498
  %v1027 = vsel %vm74, %v1026, %v604
  %v1028 = vsel %vm66, %v707, %v812
  %v1029 = vsel %vm70, %v1028, %v918
  %v1030 = vsel %vm74, %v1029, %v1024
  %v1031 = vld [vmem:[%s5] sm:$0xff]
  %v1032 = vld [vmem:[%s5 + $0x8] sm:$0xff]
  %v1033 = vld [vmem:[%s5 + $0x10] sm:$0xff]
  %v1034 = vld [vmem:[%s5 + $0x18] sm:$0xff]
  %v1035 = vld [vmem:[%s6] sm:$0x1]
  %v1037 = vlaneseq
  %v1038 = vshrl.u32 %v1037, 7
  %v1039 = vsub.s32 0, %v1038
  %v1040 = vrot.slane %v1035, %v1039
  %1044 = vrot.lane.b32.xlu0 %v1027, 96
  %v1045 = vpop.permute.xlu0 %1044
  %1046 = vrot.lane.b32.xlu0 %v1030, 96
  %v1047 = vpop.permute.xlu0 %1046
  %v1048 = vsel %vm96, %v1045, 0
  %v1050 = vsel %vm96, %v1047, 0
  %1052 = vmatprep.subr.mxu0 0.0
  %1053 = vmatpush1.msra.mxu0 0.0
  %1054 = vmatprep.subr.mxu0 0.0
  %1055 = vmatpush1.msra.mxu0 0.0
  %1056 = vmatprep.subr.mxu0 0.0
  %1057 = vmatpush1.msra.mxu0 0.0
  %1058 = vmatprep.subr.mxu0 0.0
  %1059 = vmatpush1.msra.mxu0 0.0
  %1060 = vmatprep.subr.mxu0 0.0
  %1061 = vmatpush1.msra.mxu0 0.0
  %1062 = vmatprep.subr.mxu0 0.0
  %1063 = vmatpush1.msra.mxu0 0.0
  %1064 = vmatprep.subr.mxu0 0.0
  %1065 = vmatpush1.msra.mxu0 0.0
  %1066 = vmatprep.subr.mxu0 0.0
  %1067 = vmatpush1.msra.mxu0 0.0
  %1068 = vmatprep.subr.mxu0 0.0
  %1069 = vmatpush1.msra.mxu0 0.0
  %1070 = vmatprep.subr.mxu0 0.0
  %1071 = vmatpush1.msra.mxu0 0.0
  %1072 = vmatprep.subr.mxu0 0.0
  %1073 = vmatpush1.msra.mxu0 0.0
  %1074 = vmatprep.subr.mxu0 0.0
  %1075 = vmatpush1.msra.mxu0 0.0
  %1076 = vmatprep.subr.mxu0 0.0
  %1077 = vmatpush1.msra.mxu0 %v1034
  %1078 = vmatprep.subr.mxu0 0.0
  %1079 = vmatpush1.msra.mxu0 %v1033
  %1080 = vmatprep.subr.mxu0 0.0
  %1081 = vmatpush1.msra.mxu0 %v1032
  %1082 = vmatprep.subr.mxu0 0.0
  %1083 = vmatpush1.msra.mxu0 %v1031
  %1084 = vmatprep.subr.mxu0 0.0
  %1085 = vmatpush2.msra.mxu0 0.0
  %1086 = vmatprep.subr.mxu0 0.0
  %1087 = vmatpush2.msra.mxu0 0.0
  %1088 = vmatprep.subr.mxu0 0.0
  %1089 = vmatpush2.msra.mxu0 0.0
  %1090 = vmatprep.subr.mxu0 0.0
  %1091 = vmatpush2.msra.mxu0 0.0
  %1092 = vmatprep.subr.mxu0 0.0
  %1093 = vmatpush2.msra.mxu0 0.0
  %1094 = vmatprep.subr.mxu0 0.0
  %1095 = vmatpush2.msra.mxu0 0.0
  %1096 = vmatprep.subr.mxu0 0.0
  %1097 = vmatpush2.msra.mxu0 0.0
  %1098 = vmatprep.subr.mxu0 0.0
  %1099 = vmatpush2.msra.mxu0 0.0
  %1100 = vmatprep.subr.mxu0 0.0
  %1101 = vmatpush2.msra.mxu0 0.0
  %1102 = vmatprep.subr.mxu0 0.0
  %1103 = vmatpush2.msra.mxu0 0.0
  %1104 = vmatprep.subr.mxu0 0.0
  %1105 = vmatpush2.msra.mxu0 0.0
  %1106 = vmatprep.subr.mxu0 0.0
  %1107 = vmatpush2.msra.mxu0 0.0
  %1108 = vmatprep.subr.mxu0 0.0
  %1109 = vmatpush2.msra.mxu0 0.0
  %1110 = vmatprep.subr.mxu0 0.0
  %1111 = vmatpush2.msra.mxu0 0.0
  %1112 = vmatprep.subr.mxu0 0.0
  %1113 = vmatpush2.msra.mxu0 0.0
  %1114 = vmatprep.subr.mxu0 0.0
  %1115 = vmatpush2.msra.mxu0 0.0
  %1116 = vmatprep.mubr.f32.mxu0 0.0
  %1117 = vmatmul.mubr.f32.gmra.mxu0 %v1048
  %v1118 = vpop.f32.mrf.mxu0
  %v1119 = vadd.f32 %v1040, %v1118
  %v1120 = vpop.f32.mrf.mxu0
  %1121 = vmatprep.mubr.f32.mxu0 0.0
  %1122 = vmatmul.mubr.f32.gmra.mxu0 %v1050
  %v1123 = vpop.f32.mrf.mxu0
  %v1124 = vadd.f32 %v1040, %v1123
  %v1125 = vpop.f32.mrf.mxu0
  %1126 = vdwg.mxu0
  %v1127 = vmax.f32 %v1119, 0.0
  %v1128 = vmax.f32 %v1124, 0.0
  %v1129 = vld [vmem:[%s7] sm:$0xff]
  %v1130 = vld [vmem:[%s7 + $0x8] sm:$0xff]
  %v1131 = vld [vmem:[%s7 + $0x10] sm:$0xff]
  %v1132 = vld [vmem:[%s7 + $0x18] sm:$0xff]
  %v1133 = vld [vmem:[%s7 + $0x20] sm:$0xff]
  %v1134 = vld [vmem:[%s7 + $0x28] sm:$0xff]
  %v1135 = vld [vmem:[%s7 + $0x30] sm:$0xff]
  %v1136 = vld [vmem:[%s7 + $0x38] sm:$0xff]
  %v1137 = vld [vmem:[%s7 + $0x40] sm:$0xff]
  %v1138 = vld [vmem:[%s7 + $0x48] sm:$0xff]
  %v1139 = vld [vmem:[%s7 + $0x50] sm:$0xff]
  %v1140 = vld [vmem:[%s7 + $0x58] sm:$0xff]
  %v1141 = vld [vmem:[%s7 + $0x60] sm:$0xff]
  %v1142 = vld [vmem:[%s7 + $0x68] sm:$0xff]
  %v1143 = vld [vmem:[%s7 + $0x70] sm:$0xff]
  %v1144 = vld [vmem:[%s7 + $0x78] sm:$0xff]
  %v1145 = vld [vmem:[%s8] sm:$0x1]
  %v1147 = vlaneseq
  %v1148 = vshrl.u32 %v1147, 7
  %v1149 = vsub.s32 0, %v1148
  %v1150 = vrot.slane %v1145, %v1149
  %1152 = vmatprep.subr.mxu0 0.0
  %1153 = vmatpush1.msra.mxu0 %v1144
  %1154 = vmatprep.subr.mxu0 0.0
  %1155 = vmatpush1.msra.mxu0 %v1143
  %1156 = vmatprep.subr.mxu0 0.0
  %1157 = vmatpush1.msra.mxu0 %v1142
  %1158 = vmatprep.subr.mxu0 0.0
  %1159 = vmatpush1.msra.mxu0 %v1141
  %1160 = vmatprep.subr.mxu0 0.0
  %1161 = vmatpush1.msra.mxu0 %v1140
  %1162 = vmatprep.subr.mxu0 0.0
  %1163 = vmatpush1.msra.mxu0 %v1139
  %1164 = vmatprep.subr.mxu0 0.0
  %1165 = vmatpush1.msra.mxu0 %v1138
  %1166 = vmatprep.subr.mxu0 0.0
  %1167 = vmatpush1.msra.mxu0 %v1137
  %1168 = vmatprep.subr.mxu0 0.0
  %1169 = vmatpush1.msra.mxu0 %v1136
  %1170 = vmatprep.subr.mxu0 0.0
  %1171 = vmatpush1.msra.mxu0 %v1135
  %1172 = vmatprep.subr.mxu0 0.0
  %1173 = vmatpush1.msra.mxu0 %v1134
  %1174 = vmatprep.subr.mxu0 0.0
  %1175 = vmatpush1.msra.mxu0 %v1133
  %1176 = vmatprep.subr.mxu0 0.0
  %1177 = vmatpush1.msra.mxu0 %v1132
  %1178 = vmatprep.subr.mxu0 0.0
  %1179 = vmatpush1.msra.mxu0 %v1131
  %1180 = vmatprep.subr.mxu0 0.0
  %1181 = vmatpush1.msra.mxu0 %v1130
  %1182 = vmatprep.subr.mxu0 0.0
  %1183 = vmatpush1.msra.mxu0 %v1129
  %1184 = vmatprep.subr.mxu0 0.0
  %1185 = vmatpush2.msra.mxu0 0.0
  %1186 = vmatprep.subr.mxu0 0.0
  %1187 = vmatpush2.msra.mxu0 0.0
  %1188 = vmatprep.subr.mxu0 0.0
  %1189 = vmatpush2.msra.mxu0 0.0
  %1190 = vmatprep.subr.mxu0 0.0
  %1191 = vmatpush2.msra.mxu0 0.0
  %1192 = vmatprep.subr.mxu0 0.0
  %1193 = vmatpush2.msra.mxu0 0.0
  %1194 = vmatprep.subr.mxu0 0.0
  %1195 = vmatpush2.msra.mxu0 0.0
  %1196 = vmatprep.subr.mxu0 0.0
  %1197 = vmatpush2.msra.mxu0 0.0
  %1198 = vmatprep.subr.mxu0 0.0
  %1199 = vmatpush2.msra.mxu0 0.0
  %1200 = vmatprep.subr.mxu0 0.0
  %1201 = vmatpush2.msra.mxu0 0.0
  %1202 = vmatprep.subr.mxu0 0.0
  %1203 = vmatpush2.msra.mxu0 0.0
  %1204 = vmatprep.subr.mxu0 0.0
  %1205 = vmatpush2.msra.mxu0 0.0
  %1206 = vmatprep.subr.mxu0 0.0
  %1207 = vmatpush2.msra.mxu0 0.0
  %1208 = vmatprep.subr.mxu0 0.0
  %1209 = vmatpush2.msra.mxu0 0.0
  %1210 = vmatprep.subr.mxu0 0.0
  %1211 = vmatpush2.msra.mxu0 0.0
  %1212 = vmatprep.subr.mxu0 0.0
  %1213 = vmatpush2.msra.mxu0 0.0
  %1214 = vmatprep.subr.mxu0 0.0
  %1215 = vmatpush2.msra.mxu0 0.0
  %1216 = vmatprep.mubr.f32.mxu0 0.0
  %1217 = vmatmul.mubr.f32.gmra.mxu0 %v1127
  %v1218 = vpop.f32.mrf.mxu0
  %v1219 = vadd.f32 %v1150, %v1218
  %v1220 = vpop.f32.mrf.mxu0
  %1221 = vmatprep.mubr.f32.mxu0 0.0
  %1222 = vmatmul.mubr.f32.gmra.mxu0 %v1128
  %v1223 = vpop.f32.mrf.mxu0
  %v1224 = vadd.f32 %v1150, %v1223
  %v1225 = vpop.f32.mrf.mxu0
  %1226 = vdwg.mxu0
  %v1228 = vrot.slane %v1219, 1
  %v1230 = vrot.slane %v1219, 2
  %v1232 = vrot.slane %v1219, 3
  %v1235 = vrot.slane %v1224, 4
  %v1237 = vrot.slane %v1224, 5
  %v1239 = vrot.slane %v1224, 6
  %v1241 = vrot.slane %v1224, 7
  %v1243 = vsel %vm64, %v1219, %v1228
  %v1244 = vsel %vm66, %v1243, %v1230
  %v1245 = vsel %vm68, %v1244, %v1232
  %v1246 = vsel %vm70, %v1245, %v1235
  %v1247 = vsel %vm72, %v1246, %v1237
  %v1248 = vsel %vm74, %v1247, %v1239
  %v1249 = vsel %vm76, %v1248, %v1241
  %v1250 = vrot.slane %v1219, 4
  %v1252 = vsel %vm64, %v1228, %v1230
  %v1253 = vsel %vm66, %v1252, %v1232
  %v1254 = vsel %vm68, %v1253, %v1250
  %v1255 = vsel %vm70, %v1254, %v1237
  %v1256 = vsel %vm72, %v1255, %v1239
  %v1257 = vsel %vm74, %v1256, %v1241
  %v1258 = vsel %vm76, %v1257, %v1224
  %v1259 = vmax.f32 %v1249, %v1258
  %v1260 = vsub.f32 %v1249, %v1259
  %v1261 = vmul.f32 %v1260, 1.442695
  %v1262 = vpow.pop %v1261
  %v1263 = vsub.f32 %v1258, %v1259
  %v1264 = vmul.f32 %v1263, 1.442695
  %v1265 = vpow.pop %v1264
  %v1266 = vadd.f32 %v1262, %v1265
  %v1267 = vlog2.pop %v1266
  %v1268 = vmul.f32 %v1267, 0.6931472
  %v1269 = vadd.f32 %v1259, %v1268
  %v1270 = vsub.f32 %v1249, %v1269
  %v1271 = vsub.f32 %v1258, %v1269
  %vm1272 = vcmask 15360
  %1273 = vst.msk [vmem:[%s9] sm:$0xff] %vm1272, %v1270
  %1274 = vst.msk [vmem:[%s9 + $0x8] sm:$0xff] %vm1272, %v1271
  // Predicated region
  $region38: #{diagnostic_classifier_forward.1} parent=0 // pred_check
    _
  $region39: #{diagnostic_classifier_forward.1} parent=0 // pred_check_branch
    %1276 = sbr.rel (0) target = $region41
  $region40: #{diagnostic_classifier_forward.1} parent=0 // pred_region
    _
  $region41: #{diagnostic_classifier_forward.1} parent=0 // pred_fallthru
    _
  // Predicated region
  $region42: #{diagnostic_classifier_forward.1} parent=0 // pred_check
    _
  $region43: #{diagnostic_classifier_forward.1} parent=0 // pred_check_branch
    %1278 = sbr.rel (0) target = $region45
  $region44: #{diagnostic_classifier_forward.1} parent=0 // pred_region
    _
  $region45: #{diagnostic_classifier_forward.1} parent=0 // pred_fallthru
    _

</llo_original>
